<compile_context>
chip_gen: v7x
topology: tpu7x:2x2x1
jax: 0.10.0
libtpu: 0.0.40
codegen_flags: <defaults>
</compile_context>

<pallas_src>
import jax
import jax.numpy as jnp
from jax.experimental import pallas as pl
from jax.experimental.pallas import tpu as pltpu


def _round_up(x, m):
    return ((x + m - 1) // m) * m


def _rgcn_kernel(a_t_ref, inv_deg_ref, x_ref, w_ref, loop_w_ref, bias_ref, out_ref):
    """Grid = (dst-tile i [parallel], relation r [arbitrary, reduction])."""
    i = pl.program_id(0)
    r = pl.program_id(1)
    t = out_ref.shape[0]  # dst tile size (static)

    # Init the resident output block with the self-loop term + bias on the first relation.
    @pl.when(r == 0)
    def _():
        row0 = pl.multiple_of(i * t, t)
        x_tile = x_ref[pl.ds(row0, t), :].astype(jnp.float32)   # dst rows of X (bf16 -> f32)
        out_ref[...] = (
            jnp.dot(x_tile, loop_w_ref[...], preferred_element_type=jnp.float32)
            + bias_ref[...]
        )

    # Message passing for relation r over this dst-node tile:
    #   msg = (A_r^T)[tile] @ X      (bf16 x bf16 -> f32 accumulate on MXU)
    msg = jnp.dot(a_t_ref[0], x_ref[...], preferred_element_type=jnp.float32)  # (T, F_in)
    # right-normalize by precomputed 1 / max(in-degree, 1)
    msg = msg * inv_deg_ref[0]                                                  # (T, F_in)

    # Per-relation linear transform, accumulated into the resident output block.
    # (On v7x this maps to repeated MXU matmuls into the same f32 accumulator tile.)
    out_ref[...] += jnp.dot(msg, w_ref[0], preferred_element_type=jnp.float32)

    # Finalize: relu on the last relation. Dropout p=0.0 -> identity.
    @pl.when(r == pl.num_programs(1) - 1)
    def _():
        out_ref[...] = jnp.maximum(out_ref[...], 0.0)


def rel_graph_conv_layer(a_t, x, w, loop_w, bias, *, tile_n=256):
    """R-GCN layer forward.

    a_t:    [R, N, N] per-relation adjacency, already transposed (A_t[r, dst, src]).
    x:      [N, F_in] node features (any float dtype; used as bf16 inside the kernel).
    w:      [R, F_in, F_out] per-relation weights (f32).
    loop_w: [F_in, F_out] self-loop weight (f32).
    bias:   [F_out] bias (f32).
    Returns [N, F_out] float32.
    """
    R, N, _ = a_t.shape
    F_in = x.shape[1]
    F_out = w.shape[2]

    # Precompute right-norm 1/max(in-degree, 1) outside the kernel (f32, exact).
    deg = jnp.sum(a_t.astype(jnp.float32), axis=-1, keepdims=True)   # [R, N, 1]
    inv_deg = 1.0 / jnp.maximum(deg, 1.0)

    # Pad to TPU-friendly shapes: lane-dense (x128) features, tile-aligned nodes.
    f_in_p = _round_up(F_in, 128)
    f_out_p = _round_up(F_out, 128)
    t = min(tile_n, _round_up(N, 8))
    n_p = _round_up(N, t)

    a_t_p = jnp.pad(a_t, ((0, 0), (0, n_p - N), (0, n_p - N))).astype(jnp.bfloat16)
    x_p = jnp.pad(x.astype(jnp.float32), ((0, n_p - N), (0, f_in_p - F_in))).astype(jnp.bfloat16)
    w_p = jnp.pad(w.astype(jnp.float32), ((0, 0), (0, f_in_p - F_in), (0, f_out_p - F_out)))
    loop_w_p = jnp.pad(loop_w.astype(jnp.float32), ((0, f_in_p - F_in), (0, f_out_p - F_out)))
    bias_p = jnp.pad(bias.astype(jnp.float32).reshape(1, -1), ((0, 0), (0, f_out_p - F_out)))
    inv_deg_p = jnp.pad(inv_deg, ((0, 0), (0, n_p - N), (0, 0)), constant_values=1.0)

    out = pl.pallas_call(
        _rgcn_kernel,
        out_shape=jax.ShapeDtypeStruct((n_p, f_out_p), jnp.float32),
        grid_spec=pltpu.PrefetchScalarGridSpec(
            num_scalar_prefetch=0,
            grid=(n_p // t, R),
            in_specs=[
                pl.BlockSpec((1, t, n_p), lambda i, r: (r, i, 0)),           # A^T[r] dst-tile
                pl.BlockSpec((1, t, 1), lambda i, r: (r, i, 0)),             # 1/deg dst-tile
                pl.BlockSpec((n_p, f_in_p), lambda i, r: (0, 0)),            # X (resident)
                pl.BlockSpec((1, f_in_p, f_out_p), lambda i, r: (r, 0, 0)),  # W_r
                pl.BlockSpec((f_in_p, f_out_p), lambda i, r: (0, 0)),        # loop weight
                pl.BlockSpec((1, f_out_p), lambda i, r: (0, 0)),             # bias
            ],
            out_specs=pl.BlockSpec((t, f_out_p), lambda i, r: (i, 0)),
        ),
        compiler_params=pltpu.CompilerParams(
            dimension_semantics=("parallel", "arbitrary"),   # dst tiles parallel, relations reduce
            vmem_limit_bytes=48 * 1024 * 1024,
        ),
    )(a_t_p, inv_deg_p, x_p, w_p, loop_w_p, bias_p)

    return out[:N, :F_out]


def _xavier_uniform(key, shape, gain):
    fan_in, fan_out = shape[-2], shape[-1]
    limit = gain * jnp.sqrt(6.0 / (fan_in + fan_out))
    return jax.random.uniform(key, shape, jnp.float32, -limit, limit)


def _reference(a_t, x, w, loop_w, bias):
    hp = jax.lax.Precision.HIGHEST
    a = a_t.astype(jnp.float32)
    xf = x.astype(jnp.float32)
    deg = jnp.sum(a, axis=-1, keepdims=True)                          # [R, N, 1]
    norm = 1.0 / jnp.maximum(deg, 1.0)
    msg = jnp.einsum("rds,sf->rdf", a, xf, precision=hp) * norm       # [R, N, F_in]
    h = jnp.einsum("rdf,rfo->do", msg, w.astype(jnp.float32), precision=hp)
    h = h + jnp.einsum("nf,fo->no", xf, loop_w.astype(jnp.float32), precision=hp)
    h = h + bias.astype(jnp.float32)[None, :]
    return jnp.maximum(h, 0.0)


if __name__ == "__main__":
    key = jax.random.PRNGKey(0)
    R = 3          # number of relations
    N = 512        # number of nodes (exercises dst tiling: 2 tiles of 256)
    F_in = 64      # in_feat
    F_out = 64     # out_feat

    k_adj, k_x, k_w, k_loop, k_b = jax.random.split(key, 5)

    # Dense per-relation adjacency, already transposed: A_t[r, dst, src] = 1 if edge src->dst.
    a_t = jax.random.bernoulli(k_adj, p=0.05, shape=(R, N, N)).astype(jnp.float32)
    # Node features stored in bf16 (what the kernel consumes); reference upcasts the same values.
    x = jax.random.normal(k_x, (N, F_in), jnp.float32).astype(jnp.bfloat16)

    gain = jnp.sqrt(2.0)  # nn.init.calculate_gain('relu')
    w = _xavier_uniform(k_w, (R, F_in, F_out), gain)
    loop_w = _xavier_uniform(k_loop, (F_in, F_out), gain)
    # Module inits h_bias to zeros; use a nonzero bias here to actually exercise the add.
    bias = 0.1 * jax.random.normal(k_b, (F_out,), jnp.float32)

    out = rel_graph_conv_layer(a_t, x, w, loop_w, bias)
    out = jax.block_until_ready(out)

    ref = _reference(a_t, x, w, loop_w, bias)
    assert out.shape == (N, F_out)
    assert jnp.allclose(out, ref, atol=5e-3, rtol=5e-3), float(jnp.max(jnp.abs(out - ref)))

    # TODO(synk): dgl.WeightBasis path (num_bases < len(rel_names)) would be a coeff @ basis
    # contraction in plain JAX before the kernel; not needed for this config.
    print("KERNEL_OK")
</pallas_src>

<mosaic_0001>
module attributes {stable_mosaic.version = 11 : i64} {
  func.func @_rgcn_kernel(%arg0: i32, %arg1: i32, %arg2: memref<1x256x512xbf16, #tpu.memory_space<vmem>>, %arg3: memref<1x256x1xf32, #tpu.memory_space<vmem>>, %arg4: memref<512x128xbf16, #tpu.memory_space<vmem>>, %arg5: memref<1x128x128xf32, #tpu.memory_space<vmem>>, %arg6: memref<128x128xf32, #tpu.memory_space<vmem>>, %arg7: memref<1x128xf32, #tpu.memory_space<vmem>>, %arg8: memref<256x128xf32, #tpu.memory_space<vmem>>) attributes {dimension_semantics = [#tpu.dimension_semantics<parallel>, #tpu.dimension_semantics<arbitrary>], iteration_bounds = array<i64: 2, 3>, scalar_prefetch = 0 : i64, scratch_operands = 0 : i64, tpu.core_type = #tpu.core_type<tc>, window_params = [{transform_indices = @transform_0, window_bounds = array<i64: 1, 256, 512>}, {transform_indices = @transform_1, window_bounds = array<i64: 1, 256, 1>}, {pipeline_mode = #tpu.pipeline_mode<synchronous>, transform_indices = @transform_2, window_bounds = array<i64: 512, 128>}, {transform_indices = @transform_3, window_bounds = array<i64: 1, 128, 128>}, {pipeline_mode = #tpu.pipeline_mode<synchronous>, transform_indices = @transform_4, window_bounds = array<i64: 128, 128>}, {pipeline_mode = #tpu.pipeline_mode<synchronous>, transform_indices = @transform_5, window_bounds = array<i64: 1, 128>}, {transform_indices = @transform_6, window_bounds = array<i64: 256, 128>}]} {
    %c0_i32 = arith.constant 0 : i32
    %0 = arith.cmpi eq, %arg1, %c0_i32 : i32
    %1 = arith.extui %0 : i1 to i32
    %c0_i32_0 = arith.constant 0 : i32
    %2 = arith.cmpi ne, %1, %c0_i32_0 : i32
    scf.if %2 {
      %c256_i32 = arith.constant 256 : i32
      %20 = arith.muli %arg0, %c256_i32 : i32
      %21 = tpu.assume_multiple %20, 256 : i32
      %22 = arith.index_cast %21 : i32 to index
      %c0_17 = arith.constant 0 : index
      %23 = vector.load %arg4[%22, %c0_17] : memref<512x128xbf16, #tpu.memory_space<vmem>>, vector<256x128xbf16>
      %24 = arith.extf %23 : vector<256x128xbf16> to vector<256x128xf32>
      %c0_18 = arith.constant 0 : index
      %c0_19 = arith.constant 0 : index
      %25 = vector.load %arg6[%c0_18, %c0_19] : memref<128x128xf32, #tpu.memory_space<vmem>>, vector<128x128xf32>
      %cst_20 = arith.constant dense<0.000000e+00> : vector<256x128xf32>
      %26 = tpu.matmul %24, %25, %cst_20 {dimension_numbers = #tpu.dot_dimension_numbers<[1], [0], [0], [1], [0, 0, 1, 1], [], []>} : vector<256x128xf32>, vector<128x128xf32>, vector<256x128xf32> -> vector<256x128xf32>
      %c0_21 = arith.constant 0 : index
      %c0_22 = arith.constant 0 : index
      %27 = vector.load %arg7[%c0_21, %c0_22] : memref<1x128xf32, #tpu.memory_space<vmem>>, vector<1x128xf32>
      %28 = vector.broadcast %27 : vector<1x128xf32> to vector<256x128xf32>
      %29 = arith.addf %26, %28 : vector<256x128xf32>
      %c0_23 = arith.constant 0 : index
      %c0_24 = arith.constant 0 : index
      %30 = vector.load %arg8[%c0_23, %c0_24] : memref<256x128xf32, #tpu.memory_space<vmem>>, vector<256x128xf32>
      tpu.vector_store %arg8[%c0_23, %c0_24], %29 {strides = array<i32>} : memref<256x128xf32, #tpu.memory_space<vmem>>, vector<256x128xf32>,
    } else {
    }
    %c0 = arith.constant 0 : index
    %c0_1 = arith.constant 0 : index
    %c0_2 = arith.constant 0 : index
    %3 = vector.load %arg2[%c0, %c0_1, %c0_2] : memref<1x256x512xbf16, #tpu.memory_space<vmem>>, vector<1x256x512xbf16>
    %4 = vector.shape_cast %3 : vector<1x256x512xbf16> to vector<256x512xbf16>
    %c0_3 = arith.constant 0 : index
    %c0_4 = arith.constant 0 : index
    %5 = vector.load %arg4[%c0_3, %c0_4] : memref<512x128xbf16, #tpu.memory_space<vmem>>, vector<512x128xbf16>
    %cst = arith.constant dense<0.000000e+00> : vector<256x128xf32>
    %6 = tpu.matmul %4, %5, %cst {dimension_numbers = #tpu.dot_dimension_numbers<[1], [0], [0], [1], [0, 0, 1, 1], [], []>} : vector<256x512xbf16>, vector<512x128xbf16>, vector<256x128xf32> -> vector<256x128xf32>
    %c0_5 = arith.constant 0 : index
    %c0_6 = arith.constant 0 : index
    %c0_7 = arith.constant 0 : index
    %7 = vector.load %arg3[%c0_5, %c0_6, %c0_7] : memref<1x256x1xf32, #tpu.memory_space<vmem>>, vector<1x256x1xf32>
    %8 = vector.shape_cast %7 : vector<1x256x1xf32> to vector<256x1xf32>
    %9 = vector.broadcast %8 : vector<256x1xf32> to vector<256x128xf32>
    %10 = arith.mulf %6, %9 : vector<256x128xf32>
    %c0_8 = arith.constant 0 : index
    %c0_9 = arith.constant 0 : index
    %11 = vector.load %arg8[%c0_8, %c0_9] : memref<256x128xf32, #tpu.memory_space<vmem>>, vector<256x128xf32>
    %c0_10 = arith.constant 0 : index
    %c0_11 = arith.constant 0 : index
    %c0_12 = arith.constant 0 : index
    %12 = vector.load %arg5[%c0_10, %c0_11, %c0_12] : memref<1x128x128xf32, #tpu.memory_space<vmem>>, vector<1x128x128xf32>
    %13 = vector.shape_cast %12 : vector<1x128x128xf32> to vector<128x128xf32>
    %cst_13 = arith.constant dense<0.000000e+00> : vector<256x128xf32>
    %14 = tpu.matmul %10, %13, %cst_13 {dimension_numbers = #tpu.dot_dimension_numbers<[1], [0], [0], [1], [0, 0, 1, 1], [], []>} : vector<256x128xf32>, vector<128x128xf32>, vector<256x128xf32> -> vector<256x128xf32>
    %15 = arith.addf %11, %14 : vector<256x128xf32>
    %c0_14 = arith.constant 0 : index
    %c0_15 = arith.constant 0 : index
    %16 = vector.load %arg8[%c0_14, %c0_15] : memref<256x128xf32, #tpu.memory_space<vmem>>, vector<256x128xf32>
    tpu.vector_store %arg8[%c0_14, %c0_15], %15 {strides = array<i32>} : memref<256x128xf32, #tpu.memory_space<vmem>>, vector<256x128xf32>,
    %c2_i32 = arith.constant 2 : i32
    %17 = arith.cmpi eq, %arg1, %c2_i32 : i32
    %18 = arith.extui %17 : i1 to i32
    %c0_i32_16 = arith.constant 0 : i32
    %19 = arith.cmpi ne, %18, %c0_i32_16 : i32
    scf.if %19 {
      %c0_17 = arith.constant 0 : index
      %c0_18 = arith.constant 0 : index
      %20 = vector.load %arg8[%c0_17, %c0_18] : memref<256x128xf32, #tpu.memory_space<vmem>>, vector<256x128xf32>
      %cst_19 = arith.constant 0.000000e+00 : f32
      %21 = vector.broadcast %cst_19 : f32 to vector<256x128xf32>
      %22 = arith.maximumf %20, %21 : vector<256x128xf32>
      %c0_20 = arith.constant 0 : index
      %c0_21 = arith.constant 0 : index
      %23 = vector.load %arg8[%c0_20, %c0_21] : memref<256x128xf32, #tpu.memory_space<vmem>>, vector<256x128xf32>
      tpu.vector_store %arg8[%c0_20, %c0_21], %22 {strides = array<i32>} : memref<256x128xf32, #tpu.memory_space<vmem>>, vector<256x128xf32>,
    } else {
    }
    return
  }
  func.func @transform_0(%arg0: i32, %arg1: i32) -> (i32, i32, i32) {
    %c0_i32 = arith.constant 0 : i32
    %c0_i32_0 = arith.constant 0 : i32
    return %arg1, %arg0, %c0_i32 : i32, i32, i32
  }
  func.func @transform_1(%arg0: i32, %arg1: i32) -> (i32, i32, i32) {
    %c0_i32 = arith.constant 0 : i32
    %c0_i32_0 = arith.constant 0 : i32
    return %arg1, %arg0, %c0_i32 : i32, i32, i32
  }
  func.func @transform_2(%arg0: i32, %arg1: i32) -> (i32, i32) {
    %c0_i32 = arith.constant 0 : i32
    %c0_i32_0 = arith.constant 0 : i32
    %c0_i32_1 = arith.constant 0 : i32
    return %c0_i32, %c0_i32_0 : i32, i32
  }
  func.func @transform_3(%arg0: i32, %arg1: i32) -> (i32, i32, i32) {
    %c0_i32 = arith.constant 0 : i32
    %c0_i32_0 = arith.constant 0 : i32
    %c0_i32_1 = arith.constant 0 : i32
    return %arg1, %c0_i32, %c0_i32_0 : i32, i32, i32
  }
  func.func @transform_4(%arg0: i32, %arg1: i32) -> (i32, i32) {
    %c0_i32 = arith.constant 0 : i32
    %c0_i32_0 = arith.constant 0 : i32
    %c0_i32_1 = arith.constant 0 : i32
    return %c0_i32, %c0_i32_0 : i32, i32
  }
  func.func @transform_5(%arg0: i32, %arg1: i32) -> (i32, i32) {
    %c0_i32 = arith.constant 0 : i32
    %c0_i32_0 = arith.constant 0 : i32
    %c0_i32_1 = arith.constant 0 : i32
    return %c0_i32, %c0_i32_0 : i32, i32
  }
  func.func @transform_6(%arg0: i32, %arg1: i32) -> (i32, i32) {
    %c0_i32 = arith.constant 0 : i32
    %c0_i32_0 = arith.constant 0 : i32
    return %arg0, %c0_i32 : i32, i32
  }
}

</mosaic_0001>

<llo_original>
// kernel: tpu_custom_call.1
$region0: #{tpu_custom_call.1}
  #allocation0 [shape = 'u32[]', space=smem, size = 0x4, offset = 0x4, fixed_abs, tag = 'smem constant byte address 0x4 - core index']
  #allocation1 [shape = 'u32[144,128]{1,0:T(1,128)}', space=vmem, size = 0x12000, scoped, tag = 'internal scratch']
  %s0 = inlined_call_operand.hbm [shape: bf16[3,512,512], index: 0, kind: input, shape index: {}]
  %s1 = inlined_call_operand.vmem [shape: f32[3,512,1], index: 1, kind: input, shape index: {}]
  %s2 = inlined_call_operand.hbm [shape: bf16[512,128], index: 2, kind: input, shape index: {}]
  %s3 = inlined_call_operand.hbm [shape: f32[3,128,128], index: 3, kind: input, shape index: {}]
  %s4 = inlined_call_operand.hbm [shape: f32[128,128], index: 4, kind: input, shape index: {}]
  %s5 = inlined_call_operand.hbm [shape: f32[1,128], index: 5, kind: input, shape index: {}]
  %s6 = inlined_call_operand.hbm [shape: f32[512,128], index: 6, kind: output, shape index: {}]
  %s7 = sld [smem:[#allocation0]]
  $region85: #{tpu_custom_call.1} parent=0
    _
  %s9 = ssub.s32 1, %s7
  %s10 = scalar_select 0, %s9, %s7
  $region1: #{tpu_custom_call.1} parent=0
    #allocation2 [shape = 'u8[524288]{0}', space=vmem, size = 0x80000, scoped, tag = 'input window, operand 0']
    #allocation3 [shape = 's32[2]{0}', space=sflag, size = 0x8, scoped, tag = 'scoped memory for tpu_custom_call.1']
    #allocation4 [shape = 's32[2]{0}', space=sflag, size = 0x8, scoped, tag = 'scoped memory for tpu_custom_call.1']
    #allocation5 [shape = 'u8[131072]{0}', space=vmem, size = 0x20000, scoped, tag = 'input window, operand 2, single buffered']
    #allocation6 [shape = 's32[1]{0}', space=sflag, size = 0x4, scoped, tag = 'scoped memory for tpu_custom_call.1']
    #allocation7 [shape = 'u8[131072]{0}', space=vmem, size = 0x20000, scoped, tag = 'input window, operand 3']
    #allocation8 [shape = 'u8[65536]{0}', space=vmem, size = 0x10000, scoped, tag = 'input window, operand 4, single buffered']
    #allocation9 [shape = 'u8[512]{0}', space=vmem, size = 0x400, scoped, tag = 'input window, operand 5, single buffered']
    #allocation10 [shape = 's32[1]{0}', space=sflag, size = 0x4, scoped, tag = 'scoped memory for tpu_custom_call.1']
    #allocation11 [shape = 'u8[262144]{0}', space=vmem, size = 0x40000, scoped, tag = 'output window, operand 0']
    %11 = vsyncpa [#allocation3], 0
    %s12 = scalar_lea.sflag [#allocation3], 1
    %13 = vsyncpa %s12, 0
    %14 = vsyncpa [#allocation6], 0
    %15 = vsyncpa [#allocation10], 0
    %16 = vsyncpa [#allocation4], 0
    %s17 = scalar_lea.sflag [#allocation4], 1
    %18 = vsyncpa %s17, 0
    loop: start=0, step=1, limit=8
    $region2: #{tpu_custom_call.1} parent=1 // loop_pre_header
      _
    $region3: #{tpu_custom_call.1} parent=1 // loop_header
      %s20 = sphi 0, %s24
      %p21 = scmp.ge.s32.totalorder %s20, 8
      %s27 = sphi 0, %s39
      %s28 = sphi 0, %s35
      %s29 = sphi 0, %s27
      %s30 = sphi 0, %s28
      %s31 = sphi 0, %s29
      %s32 = sphi 0, %s30
      %s44 = sphi 0, %s46
      %s47 = sphi 0, %s44
      %s48 = sphi 0, %s47
      %s64 = sphi 0, %s48
      %s72 = sphi 0, %s74
      %s75 = sphi 0, %s72
      %s76 = sphi 0, %s75
      %s92 = sphi 0, %s76
      %s96 = sphi 0, %s96
      %s98 = sphi 0, %s96
      %s99 = sphi 0, %s98
      %s113 = sphi 0, %s99
      %s119 = sphi 0, %s121
      %s122 = sphi 0, %s119
      %s123 = sphi 0, %s122
      %s139 = sphi 0, %s123
      %s143 = sphi 0, %s143
      %s145 = sphi 0, %s143
      %s146 = sphi 0, %s145
      %s160 = sphi 0, %s146
      %s164 = sphi 0, %s164
      %s166 = sphi 0, %s164
      %s167 = sphi 0, %s166
      %s181 = sphi 0, %s167
      %s187 = sphi 0, %s189
      %s190 = sphi 0, %s187
      %s191 = sphi 0, %s190
      %s207 = sphi 0, %s191
    $region4: #{tpu_custom_call.1} parent=1 // loop_header_branch
      %23 = sbr.rel (%p21) target = $region8
    $region5: #{tpu_custom_call.1} parent=1 // loop_body
      %s25 = ssub.s32 %s20, 1
      %s26 = ssub.s32 %s20, 2
      %s33 = sadd.s32 1, %s28
      %p34 = scmp.ge.s32.totalorder %s33, 3
      %s35 = scalar_select %p34, 0, %s33
      %s36 = sadd.s32 1, %s27
      %s37 = scalar_select %p34, %s36, %s27
      %p38 = scmp.ge.s32.totalorder %s37, 2
      %s39 = scalar_select %p38, 0, %s37
      %s40 = ssub.s32 %s28, %s35
      %s41 = ssub.s32 %s27, %s39
      %s42 = sor.u32 %s40, %s41
      %p43 = scmp.eq.s32.totalorder %s42, 0
      %s45 = sadd.s32 %s44, 1
      %s46 = scalar_select %p43, %s44, %s45
      %p49 = pneg %p43
      %p50 = scmp.eq.s32.totalorder %s20, 5
      %p51 = por %p49, %p50
      %p52 = scmp.ne.s32.totalorder %s44, %s47
      %p53 = scmp.eq.s32.totalorder %s20, 0
      %p54 = por %p52, %p53
      %p55 = scmp.ne.s32.totalorder %s44, %s47
      %p56 = scmp.eq.s32.totalorder %s25, 5
      %p57 = por %p55, %p56
      %p58 = scmp.ne.s32.totalorder %s47, %s48
      %p59 = scmp.eq.s32.totalorder %s25, 0
      %p60 = por %p58, %p59
      %p61 = scmp.ne.s32.totalorder %s47, %s48
      %p62 = scmp.eq.s32.totalorder %s26, 5
      %p63 = por %p61, %p62
      %p65 = scmp.ne.s32.totalorder %s48, %s64
      %p66 = scmp.eq.s32.totalorder %s26, 0
      %p67 = por %p65, %p66
      %s68 = ssub.s32 %s28, %s35
      %s69 = ssub.s32 %s27, %s39
      %s70 = sor.u32 %s68, %s69
      %p71 = scmp.eq.s32.totalorder %s70, 0
      %s73 = sadd.s32 %s72, 1
      %s74 = scalar_select %p71, %s72, %s73
      %p77 = pneg %p71
      %p78 = scmp.eq.s32.totalorder %s20, 5
      %p79 = por %p77, %p78
      %p80 = scmp.ne.s32.totalorder %s72, %s75
      %p81 = scmp.eq.s32.totalorder %s20, 0
      %p82 = por %p80, %p81
      %p83 = scmp.ne.s32.totalorder %s72, %s75
      %p84 = scmp.eq.s32.totalorder %s25, 5
      %p85 = por %p83, %p84
      %p86 = scmp.ne.s32.totalorder %s75, %s76
      %p87 = scmp.eq.s32.totalorder %s25, 0
      %p88 = por %p86, %p87
      %p89 = scmp.ne.s32.totalorder %s75, %s76
      %p90 = scmp.eq.s32.totalorder %s26, 5
      %p91 = por %p89, %p90
      %p93 = scmp.ne.s32.totalorder %s76, %s92
      %p94 = scmp.eq.s32.totalorder %s26, 0
      %p95 = por %p93, %p94
      %s97 = sadd.s32 %s96, 1
      %p100 = scmp.eq.s32.totalorder %s20, 5
      %p101 = scmp.ne.s32.totalorder %s96, %s98
      %p102 = scmp.eq.s32.totalorder %s20, 0
      %p103 = por %p101, %p102
      %p104 = scmp.ne.s32.totalorder %s96, %s98
      %p105 = scmp.eq.s32.totalorder %s25, 5
      %p106 = por %p104, %p105
      %p107 = scmp.ne.s32.totalorder %s98, %s99
      %p108 = scmp.eq.s32.totalorder %s25, 0
      %p109 = por %p107, %p108
      %p110 = scmp.ne.s32.totalorder %s98, %s99
      %p111 = scmp.eq.s32.totalorder %s26, 5
      %p112 = por %p110, %p111
      %p114 = scmp.ne.s32.totalorder %s99, %s113
      %p115 = scmp.eq.s32.totalorder %s26, 0
      %p116 = por %p114, %p115
      %s117 = ssub.s32 %s28, %s35
      %p118 = scmp.eq.s32.totalorder %s117, 0
      %s120 = sadd.s32 %s119, 1
      %s121 = scalar_select %p118, %s119, %s120
      %p124 = pneg %p118
      %p125 = scmp.eq.s32.totalorder %s20, 5
      %p126 = por %p124, %p125
      %p127 = scmp.ne.s32.totalorder %s119, %s122
      %p128 = scmp.eq.s32.totalorder %s20, 0
      %p129 = por %p127, %p128
      %p130 = scmp.ne.s32.totalorder %s119, %s122
      %p131 = scmp.eq.s32.totalorder %s25, 5
      %p132 = por %p130, %p131
      %p133 = scmp.ne.s32.totalorder %s122, %s123
      %p134 = scmp.eq.s32.totalorder %s25, 0
      %p135 = por %p133, %p134
      %p136 = scmp.ne.s32.totalorder %s122, %s123
      %p137 = scmp.eq.s32.totalorder %s26, 5
      %p138 = por %p136, %p137
      %p140 = scmp.ne.s32.totalorder %s123, %s139
      %p141 = scmp.eq.s32.totalorder %s26, 0
      %p142 = por %p140, %p141
      %s144 = sadd.s32 %s143, 1
      %p147 = scmp.eq.s32.totalorder %s20, 5
      %p148 = scmp.ne.s32.totalorder %s143, %s145
      %p149 = scmp.eq.s32.totalorder %s20, 0
      %p150 = por %p148, %p149
      %p151 = scmp.ne.s32.totalorder %s143, %s145
      %p152 = scmp.eq.s32.totalorder %s25, 5
      %p153 = por %p151, %p152
      %p154 = scmp.ne.s32.totalorder %s145, %s146
      %p155 = scmp.eq.s32.totalorder %s25, 0
      %p156 = por %p154, %p155
      %p157 = scmp.ne.s32.totalorder %s145, %s146
      %p158 = scmp.eq.s32.totalorder %s26, 5
      %p159 = por %p157, %p158
      %p161 = scmp.ne.s32.totalorder %s146, %s160
      %p162 = scmp.eq.s32.totalorder %s26, 0
      %p163 = por %p161, %p162
      %s165 = sadd.s32 %s164, 1
      %p168 = scmp.eq.s32.totalorder %s20, 5
      %p169 = scmp.ne.s32.totalorder %s164, %s166
      %p170 = scmp.eq.s32.totalorder %s20, 0
      %p171 = por %p169, %p170
      %p172 = scmp.ne.s32.totalorder %s164, %s166
      %p173 = scmp.eq.s32.totalorder %s25, 5
      %p174 = por %p172, %p173
      %p175 = scmp.ne.s32.totalorder %s166, %s167
      %p176 = scmp.eq.s32.totalorder %s25, 0
      %p177 = por %p175, %p176
      %p178 = scmp.ne.s32.totalorder %s166, %s167
      %p179 = scmp.eq.s32.totalorder %s26, 5
      %p180 = por %p178, %p179
      %p182 = scmp.ne.s32.totalorder %s167, %s181
      %p183 = scmp.eq.s32.totalorder %s26, 0
      %p184 = por %p182, %p183
      %s185 = ssub.s32 %s27, %s39
      %p186 = scmp.eq.s32.totalorder %s185, 0
      %s188 = sadd.s32 %s187, 1
      %s189 = scalar_select %p186, %s187, %s188
      %p192 = pneg %p186
      %p193 = scmp.eq.s32.totalorder %s20, 5
      %p194 = por %p192, %p193
      %p195 = scmp.ne.s32.totalorder %s187, %s190
      %p196 = scmp.eq.s32.totalorder %s20, 0
      %p197 = por %p195, %p196
      %p198 = scmp.ne.s32.totalorder %s187, %s190
      %p199 = scmp.eq.s32.totalorder %s25, 5
      %p200 = por %p198, %p199
      %p201 = scmp.ne.s32.totalorder %s190, %s191
      %p202 = scmp.eq.s32.totalorder %s25, 0
      %p203 = por %p201, %p202
      %p204 = scmp.ne.s32.totalorder %s190, %s191
      %p205 = scmp.eq.s32.totalorder %s26, 5
      %p206 = por %p204, %p205
      %p208 = scmp.ne.s32.totalorder %s191, %s207
      %p209 = scmp.eq.s32.totalorder %s26, 0
      %p210 = por %p208, %p209
      %p211 = scmp.le.s32.totalorder 1, %s20
      %p212 = scmp.lt.s32.totalorder %s20, 7
      %p213 = pnand %p211, %p212
      %p214 = pneg %p213
      // Predicated region
      $region9: #{tpu_custom_call.1} parent=5 // pred_check
        _
      $region10: #{tpu_custom_call.1} parent=5 // pred_check_branch
        %216 = sbr.rel (%p213) target = $region12
      $region11: #{tpu_custom_call.1} parent=5 // pred_region
        %s217 = ssub.s32 %s20, 1
        // Predicated region
        $region13: #{tpu_custom_call.1} parent=11 // pred_check
          %p218 = pneg %p109
        $region14: #{tpu_custom_call.1} parent=11 // pred_check_branch
          %220 = sbr.rel (%p218) target = $region16
        $region15: #{tpu_custom_call.1} parent=11 // pred_region
          %s222 = ssub.s32 4096, 4096
          %223 = vsyncadd [#allocation6], %s222
          %s224 = sshll.u32 [#allocation5], 4
          %s225 = int_to_ptr.vmem [resolvable:$true] %s224
          %230 = dma.hbm_to_vmem [thread:$0]  %s2, 4096, %s225, [#allocation6], 64, 64, 4
        $region16: #{tpu_custom_call.1} parent=11 // pred_fallthru
          _
        // Predicated region
        $region17: #{tpu_custom_call.1} parent=11 // pred_check
          %p231 = pneg %p156
        $region18: #{tpu_custom_call.1} parent=11 // pred_check_branch
          %233 = sbr.rel (%p231) target = $region20
        $region19: #{tpu_custom_call.1} parent=11 // pred_region
          %s235 = ssub.s32 2048, 2048
          %236 = vsyncadd [#allocation6], %s235
          %s237 = sshll.u32 [#allocation8], 4
          %s238 = int_to_ptr.vmem [resolvable:$true] %s237
          %243 = dma.hbm_to_vmem [thread:$0]  %s4, 2048, %s238, [#allocation6], 128, 128, 8
        $region20: #{tpu_custom_call.1} parent=11 // pred_fallthru
          _
        // Predicated region
        $region21: #{tpu_custom_call.1} parent=11 // pred_check
          %p244 = pneg %p177
        $region22: #{tpu_custom_call.1} parent=11 // pred_check_branch
          %246 = sbr.rel (%p244) target = $region24
        $region23: #{tpu_custom_call.1} parent=11 // pred_region
          %s248 = ssub.s32 16, 16
          %249 = vsyncadd [#allocation10], %s248
          %s251 = sshll.u32 [#allocation9], 4
          %s252 = int_to_ptr.vmem [resolvable:$true] %s251
          %254 = dma.hbm_to_vmem [thread:$0]  %s5, 16, %s252, [#allocation10]
        $region24: #{tpu_custom_call.1} parent=11 // pred_fallthru
          _
      $region12: #{tpu_custom_call.1} parent=5 // pred_fallthru
        _
      %p255 = scmp.lt.s32.totalorder %s20, 6
      // Predicated region
      $region25: #{tpu_custom_call.1} parent=5 // pred_check
        %p256 = pneg %p255
      $region26: #{tpu_custom_call.1} parent=5 // pred_check_branch
        %258 = sbr.rel (%p256) target = $region28
      $region27: #{tpu_custom_call.1} parent=5 // pred_region
        // Predicated region
        $region29: #{tpu_custom_call.1} parent=27 // pred_check
          %p259 = pneg %p54
        $region30: #{tpu_custom_call.1} parent=27 // pred_check_branch
          %261 = sbr.rel (%p259) target = $region32
        $region31: #{tpu_custom_call.1} parent=27 // pred_region
          %s262 = sand.u32 %s20, 1
          %s263 = scalar_lea.sflag [#allocation3], %s262
          %s264 = sand.u32 %s44, 1
          %s265 = smul.addr %s264, 512
          %s266 = scalar_lea.vmem [#allocation2], %s265
          %s267 = smul.u32 32, %s27
          %s269 = ssub.s32 8192, 8192
          %270 = vsyncadd %s263, %s269
          %s271 = smul.addr %s267, 4
          %s272 = smul.addr %s28, 256
          %s273 = sadd.s32 %s271, %s272
          %s274 = smul.addr %s273, 64
          %s275 = scalar_lea.hbm %s0, %s274
          %s276 = sshll.u32 %s266, 4
          %s277 = int_to_ptr.vmem [resolvable:$true] %s276
          %282 = dma.hbm_to_vmem [thread:$0]  %s275, 8192, %s277, %s263, 256, 256, 16
        $region32: #{tpu_custom_call.1} parent=27 // pred_fallthru
          _
        // Predicated region
        $region33: #{tpu_custom_call.1} parent=27 // pred_check
          %p283 = pneg %p82
        $region34: #{tpu_custom_call.1} parent=27 // pred_check_branch
          %285 = sbr.rel (%p283) target = $region36
        $region35: #{tpu_custom_call.1} parent=27 // pred_region
          %s286 = smul.u32 32, %s27
          %p287 = scmp.lt.s32.totalorder %s28, 2
          %s288 = scalar_select %p287, %s28, 2
          %p289 = scmp.lt.s32.totalorder %s286, 63
          %s290 = scalar_select %p289, %s286, 63
          %s291 = smul.addr %s288, 64
          %s292 = sadd.s32 %s290, %s291
          %s293 = smul.addr %s292, 8
          %s294 = scalar_lea.vmem %s1, %s293
          %s295 = smul.u32 32, %s27
        $region36: #{tpu_custom_call.1} parent=27 // pred_fallthru
          _
        // Predicated region
        $region37: #{tpu_custom_call.1} parent=27 // pred_check
          %p296 = pneg %p129
        $region38: #{tpu_custom_call.1} parent=27 // pred_check_branch
          %298 = sbr.rel (%p296) target = $region40
        $region39: #{tpu_custom_call.1} parent=27 // pred_region
          %s299 = sand.u32 %s20, 1
          %s300 = scalar_lea.sflag [#allocation3], %s299
          %s301 = sand.u32 %s119, 1
          %s302 = smul.addr %s301, 128
          %s303 = scalar_lea.vmem [#allocation7], %s302
          %s305 = ssub.s32 2048, 2048
          %306 = vsyncadd %s300, %s305
          %s307 = smul.addr %s28, 16
          %s308 = smul.addr %s307, 128
          %s309 = scalar_lea.hbm %s3, %s308
          %s310 = sshll.u32 %s303, 4
          %s311 = int_to_ptr.vmem [resolvable:$true] %s310
          %316 = dma.hbm_to_vmem [thread:$0]  %s309, 2048, %s311, %s300, 128, 128, 8
        $region40: #{tpu_custom_call.1} parent=27 // pred_fallthru
          _
      $region28: #{tpu_custom_call.1} parent=5 // pred_fallthru
        _
      %p317 = scmp.le.s32.totalorder 1, %s20
      %p318 = scmp.lt.s32.totalorder %s20, 7
      %p319 = pnand %p317, %p318
      %p320 = pneg %p319
      // Predicated region
      $region41: #{tpu_custom_call.1} parent=5 // pred_check
        _
      $region42: #{tpu_custom_call.1} parent=5 // pred_check_branch
        %322 = sbr.rel (%p319) target = $region44
      $region43: #{tpu_custom_call.1} parent=5 // pred_region
        %s323 = ssub.s32 %s20, 1
        %s324 = sand.u32 %s25, 1
        %s325 = scalar_lea.sflag [#allocation3], %s324
        %s326 = sand.u32 %s47, 1
        %s327 = smul.addr %s326, 512
        %s328 = scalar_lea.vmem [#allocation2], %s327
        // Predicated region
        $region45: #{tpu_custom_call.1} parent=43 // pred_check
          %p329 = pneg %p60
        $region46: #{tpu_custom_call.1} parent=43 // pred_check_branch
          %331 = sbr.rel (%p329) target = $region48
        $region47: #{tpu_custom_call.1} parent=43 // pred_region
          %332 = dma.done %s325, 8192
        $region48: #{tpu_custom_call.1} parent=43 // pred_fallthru
          _
        // Predicated region
        $region49: #{tpu_custom_call.1} parent=43 // pred_check
          %p333 = pneg %p109
        $region50: #{tpu_custom_call.1} parent=43 // pred_check_branch
          %335 = sbr.rel (%p333) target = $region52
        $region51: #{tpu_custom_call.1} parent=43 // pred_region
          %336 = dma.done [#allocation6], 4096
        $region52: #{tpu_custom_call.1} parent=43 // pred_fallthru
          _
        %s337 = sand.u32 %s25, 1
        %s338 = scalar_lea.sflag [#allocation3], %s337
        %s339 = sand.u32 %s122, 1
        %s340 = smul.addr %s339, 128
        %s341 = scalar_lea.vmem [#allocation7], %s340
        // Predicated region
        $region53: #{tpu_custom_call.1} parent=43 // pred_check
          %p342 = pneg %p135
        $region54: #{tpu_custom_call.1} parent=43 // pred_check_branch
          %344 = sbr.rel (%p342) target = $region56
        $region55: #{tpu_custom_call.1} parent=43 // pred_region
          %345 = dma.done %s338, 2048
        $region56: #{tpu_custom_call.1} parent=43 // pred_fallthru
          _
        // Predicated region
        $region57: #{tpu_custom_call.1} parent=43 // pred_check
          %p346 = pneg %p156
        $region58: #{tpu_custom_call.1} parent=43 // pred_check_branch
          %348 = sbr.rel (%p346) target = $region60
        $region59: #{tpu_custom_call.1} parent=43 // pred_region
          %349 = dma.done [#allocation6], 2048
        $region60: #{tpu_custom_call.1} parent=43 // pred_fallthru
          _
        // Predicated region
        $region61: #{tpu_custom_call.1} parent=43 // pred_check
          %p350 = pneg %p177
        $region62: #{tpu_custom_call.1} parent=43 // pred_check_branch
          %352 = sbr.rel (%p350) target = $region64
        $region63: #{tpu_custom_call.1} parent=43 // pred_region
          %353 = dma.done [#allocation10], 16
        $region64: #{tpu_custom_call.1} parent=43 // pred_fallthru
          _
        %s354 = sand.u32 %s25, 1
        %s355 = scalar_lea.sflag [#allocation3], %s354
        %s356 = sand.u32 %s47, 1
        %s357 = smul.addr %s356, 512
        %s358 = scalar_lea.vmem [#allocation2], %s357
        %p359 = pneg %p60
        %p360 = pneg %p57
        %s361 = smul.u32 32, %s29
        %p362 = scmp.lt.s32.totalorder %s30, 2
        %s363 = scalar_select %p362, %s30, 2
        %p364 = scmp.lt.s32.totalorder %s361, 63
        %s365 = scalar_select %p364, %s361, 63
        %s366 = smul.addr %s363, 64
        %s367 = sadd.s32 %s365, %s366
        %s368 = smul.addr %s367, 8
        %s369 = scalar_lea.vmem %s1, %s368
        %p370 = pneg %p88
        %p371 = pneg %p85
        %p372 = pneg %p109
        %p373 = pneg %p106
        %s374 = sand.u32 %s25, 1
        %s375 = scalar_lea.sflag [#allocation3], %s374
        %s376 = sand.u32 %s122, 1
        %s377 = smul.addr %s376, 128
        %s378 = scalar_lea.vmem [#allocation7], %s377
        %p379 = pneg %p135
        %p380 = pneg %p132
        %p381 = pneg %p156
        %p382 = pneg %p153
        %p383 = pneg %p177
        %p384 = pneg %p174
        %p385 = pneg %p203
        %p386 = pneg %p200
        %s387 = sand.u32 %s190, 1
        %s388 = scalar_lea.sflag [#allocation4], %s387
        %s389 = sand.u32 %s190, 1
        %s390 = smul.addr %s389, 256
        %s391 = scalar_lea.vmem [#allocation11], %s390
        %s392 = smul.u32 32, %s29
        %s393 = smul.u32 32, %s29
        %p394 = scmp.lt.s32.totalorder %s30, 2
        %s395 = scalar_select %p394, %s30, 2
        %p396 = scmp.lt.s32.totalorder %s393, 63
        %s397 = scalar_select %p396, %s393, 63
        %s398 = smul.addr %s395, 64
        %s399 = sadd.s32 %s397, %s398
        %s400 = smul.addr %s399, 8
        %s401 = scalar_lea.vmem %s1, %s400
        %s402 = smul.u32 32, %s29
        %s403 = smul.u32 32, %s29
        %p405 = scmp.eq.s32.totalorder %s30, 0
        // Predicated region
        $region65: #{tpu_custom_call.1} parent=43 // pred_check
          %p406 = pneg %p405
        $region66: #{tpu_custom_call.1} parent=43 // pred_check_branch
          %408 = sbr.rel (%p406) target = $region68
        $region67: #{tpu_custom_call.1} parent=43 // pred_region
          %s409 = smul.u32 %s29, 256
          %s410 = sshra.s32 %s409, 3
          %s411 = sand.u32 %s409, 7
          %s412 = smul.addr %s410, 4
          %s413 = scalar_lea.vmem [#allocation5], %s412
          %v414 = vld [vmem:[%s413] sm:$0xf]
          %v415 = vld [vmem:[%s413 + $0x4] sm:$0xf]
          %v416 = vld [vmem:[%s413 + $0x8] sm:$0xf]
          %v417 = vld [vmem:[%s413 + $0xc] sm:$0xf]
          %v418 = vld [vmem:[%s413 + $0x10] sm:$0xf]
          %v419 = vld [vmem:[%s413 + $0x14] sm:$0xf]
          %v420 = vld [vmem:[%s413 + $0x18] sm:$0xf]
          %v421 = vld [vmem:[%s413 + $0x1c] sm:$0xf]
          %v422 = vld [vmem:[%s413 + $0x20] sm:$0xf]
          %v423 = vld [vmem:[%s413 + $0x24] sm:$0xf]
          %v424 = vld [vmem:[%s413 + $0x28] sm:$0xf]
          %v425 = vld [vmem:[%s413 + $0x2c] sm:$0xf]
          %v426 = vld [vmem:[%s413 + $0x30] sm:$0xf]
          %v427 = vld [vmem:[%s413 + $0x34] sm:$0xf]
          %v428 = vld [vmem:[%s413 + $0x38] sm:$0xf]
          %v429 = vld [vmem:[%s413 + $0x3c] sm:$0xf]
          %v430 = vld [vmem:[%s413 + $0x40] sm:$0xf]
          %v431 = vld [vmem:[%s413 + $0x44] sm:$0xf]
          %v432 = vld [vmem:[%s413 + $0x48] sm:$0xf]
          %v433 = vld [vmem:[%s413 + $0x4c] sm:$0xf]
          %v434 = vld [vmem:[%s413 + $0x50] sm:$0xf]
          %v435 = vld [vmem:[%s413 + $0x54] sm:$0xf]
          %v436 = vld [vmem:[%s413 + $0x58] sm:$0xf]
          %v437 = vld [vmem:[%s413 + $0x5c] sm:$0xf]
          %v438 = vld [vmem:[%s413 + $0x60] sm:$0xf]
          %v439 = vld [vmem:[%s413 + $0x64] sm:$0xf]
          %v440 = vld [vmem:[%s413 + $0x68] sm:$0xf]
          %v441 = vld [vmem:[%s413 + $0x6c] sm:$0xf]
          %v442 = vld [vmem:[%s413 + $0x70] sm:$0xf]
          %v443 = vld [vmem:[%s413 + $0x74] sm:$0xf]
          %v444 = vld [vmem:[%s413 + $0x78] sm:$0xf]
          %v445 = vld [vmem:[%s413 + $0x7c] sm:$0xf]
          %v446 = vunpack.c.l.bf16 %v414
          %v447 = vunpack.c.l.bf16 %v415
          %v448 = vunpack.c.l.bf16 %v416
          %v449 = vunpack.c.l.bf16 %v417
          %v450 = vunpack.c.l.bf16 %v418
          %v451 = vunpack.c.l.bf16 %v419
          %v452 = vunpack.c.l.bf16 %v420
          %v453 = vunpack.c.l.bf16 %v421
          %v454 = vunpack.c.l.bf16 %v422
          %v455 = vunpack.c.l.bf16 %v423
          %v456 = vunpack.c.l.bf16 %v424
          %v457 = vunpack.c.l.bf16 %v425
          %v458 = vunpack.c.l.bf16 %v426
          %v459 = vunpack.c.l.bf16 %v427
          %v460 = vunpack.c.l.bf16 %v428
          %v461 = vunpack.c.l.bf16 %v429
          %v462 = vunpack.c.l.bf16 %v430
          %v463 = vunpack.c.l.bf16 %v431
          %v464 = vunpack.c.l.bf16 %v432
          %v465 = vunpack.c.l.bf16 %v433
          %v466 = vunpack.c.l.bf16 %v434
          %v467 = vunpack.c.l.bf16 %v435
          %v468 = vunpack.c.l.bf16 %v436
          %v469 = vunpack.c.l.bf16 %v437
          %v470 = vunpack.c.l.bf16 %v438
          %v471 = vunpack.c.l.bf16 %v439
          %v472 = vunpack.c.l.bf16 %v440
          %v473 = vunpack.c.l.bf16 %v441
          %v474 = vunpack.c.l.bf16 %v442
          %v475 = vunpack.c.l.bf16 %v443
          %v476 = vunpack.c.l.bf16 %v444
          %v477 = vunpack.c.l.bf16 %v445
          %v478 = vld [vmem:[#allocation8] sm:$0xff]
          %v479 = vld [vmem:[#allocation8 + $0x8] sm:$0xff]
          %v480 = vld [vmem:[#allocation8 + $0x10] sm:$0xff]
          %v481 = vld [vmem:[#allocation8 + $0x18] sm:$0xff]
          %v482 = vld [vmem:[#allocation8 + $0x20] sm:$0xff]
          %v483 = vld [vmem:[#allocation8 + $0x28] sm:$0xff]
          %v484 = vld [vmem:[#allocation8 + $0x30] sm:$0xff]
          %v485 = vld [vmem:[#allocation8 + $0x38] sm:$0xff]
          %v486 = vld [vmem:[#allocation8 + $0x40] sm:$0xff]
          %v487 = vld [vmem:[#allocation8 + $0x48] sm:$0xff]
          %v488 = vld [vmem:[#allocation8 + $0x50] sm:$0xff]
          %v489 = vld [vmem:[#allocation8 + $0x58] sm:$0xff]
          %v490 = vld [vmem:[#allocation8 + $0x60] sm:$0xff]
          %v491 = vld [vmem:[#allocation8 + $0x68] sm:$0xff]
          %v492 = vld [vmem:[#allocation8 + $0x70] sm:$0xff]
          %v493 = vld [vmem:[#allocation8 + $0x78] sm:$0xff]
          %v494 = vld [vmem:[#allocation9] sm:$0x1]
          %v496 = vlaneseq
          %v497 = vshrl.u32 %v496, 7
          %v498 = vsub.s32 0, %v497
          %v499 = vrot.slane %v494, %v498
          %501 = vmatprep.subr.mxu0 0.0
          %502 = vmatpush1.msra.mxu0 %v478
          %503 = vmatprep.subr.mxu0 0.0
          %504 = vmatpush1.msra.mxu0 %v479
          %505 = vmatprep.subr.mxu0 0.0
          %506 = vmatpush1.msra.mxu0 %v480
          %507 = vmatprep.subr.mxu0 0.0
          %508 = vmatpush1.msra.mxu0 %v481
          %509 = vmatprep.subr.mxu0 0.0
          %510 = vmatpush1.msra.mxu0 %v482
          %511 = vmatprep.subr.mxu0 0.0
          %512 = vmatpush1.msra.mxu0 %v483
          %513 = vmatprep.subr.mxu0 0.0
          %514 = vmatpush1.msra.mxu0 %v484
          %515 = vmatprep.subr.mxu0 0.0
          %516 = vmatpush1.msra.mxu0 %v485
          %517 = vmatprep.subr.mxu0 0.0
          %518 = vmatpush1.msra.mxu0 %v486
          %519 = vmatprep.subr.mxu0 0.0
          %520 = vmatpush1.msra.mxu0 %v487
          %521 = vmatprep.subr.mxu0 0.0
          %522 = vmatpush1.msra.mxu0 %v488
          %523 = vmatprep.subr.mxu0 0.0
          %524 = vmatpush1.msra.mxu0 %v489
          %525 = vmatprep.subr.mxu0 0.0
          %526 = vmatpush1.msra.mxu0 %v490
          %527 = vmatprep.subr.mxu0 0.0
          %528 = vmatpush1.msra.mxu0 %v491
          %529 = vmatprep.subr.mxu0 0.0
          %530 = vmatpush1.msra.mxu0 %v492
          %531 = vmatprep.subr.mxu0 0.0
          %532 = vmatpush1.msra.mxu0 %v493
          %533 = vmatprep.subr.mxu0 0.0
          %534 = vmatpush1.msra.mxu0 0.0
          %535 = vmatprep.subr.mxu0 0.0
          %536 = vmatpush1.msra.mxu0 0.0
          %537 = vmatprep.subr.mxu0 0.0
          %538 = vmatpush1.msra.mxu0 0.0
          %539 = vmatprep.subr.mxu0 0.0
          %540 = vmatpush1.msra.mxu0 0.0
          %541 = vmatprep.subr.mxu0 0.0
          %542 = vmatpush1.msra.mxu0 0.0
          %543 = vmatprep.subr.mxu0 0.0
          %544 = vmatpush1.msra.mxu0 0.0
          %545 = vmatprep.subr.mxu0 0.0
          %546 = vmatpush1.msra.mxu0 0.0
          %547 = vmatprep.subr.mxu0 0.0
          %548 = vmatpush1.msra.mxu0 0.0
          %549 = vmatprep.subr.mxu0 0.0
          %550 = vmatpush1.msra.mxu0 0.0
          %551 = vmatprep.subr.mxu0 0.0
          %552 = vmatpush1.msra.mxu0 0.0
          %553 = vmatprep.subr.mxu0 0.0
          %554 = vmatpush1.msra.mxu0 0.0
          %555 = vmatprep.subr.mxu0 0.0
          %556 = vmatpush1.msra.mxu0 0.0
          %557 = vmatprep.subr.mxu0 0.0
          %558 = vmatpush1.msra.mxu0 0.0
          %559 = vmatprep.subr.mxu0 0.0
          %560 = vmatpush1.msra.mxu0 0.0
          %561 = vmatprep.subr.mxu0 0.0
          %562 = vmatpush1.msra.mxu0 0.0
          %563 = vmatprep.subr.mxu0 0.0
          %564 = vmatpush1.msra.mxu0 0.0
          %565 = vmatprep.mubr.f32.mxu0 0.0
          %566 = vmatmul.mubr.f32.gmra.mrb[0].mxu0 %v446
          %v567 = vpop.f32.mrb[0].mxu0
          %v568 = vadd.f32 %v499, %v567
          %v569 = vpop.f32.mrb[0].mxu0
          %570 = vmatprep.mubr.f32.mxu0 0.0
          %571 = vmatmul.mubr.f32.gmra.mrb[0].mxu0 %v447
          %v572 = vpop.f32.mrb[0].mxu0
          %v573 = vadd.f32 %v499, %v572
          %v574 = vpop.f32.mrb[0].mxu0
          %575 = vmatprep.mubr.f32.mxu0 0.0
          %576 = vmatmul.mubr.f32.gmra.mrb[0].mxu0 %v448
          %v577 = vpop.f32.mrb[0].mxu0
          %v578 = vadd.f32 %v499, %v577
          %v579 = vpop.f32.mrb[0].mxu0
          %580 = vmatprep.mubr.f32.mxu0 0.0
          %581 = vmatmul.mubr.f32.gmra.mrb[0].mxu0 %v449
          %v582 = vpop.f32.mrb[0].mxu0
          %v583 = vadd.f32 %v499, %v582
          %v584 = vpop.f32.mrb[0].mxu0
          %585 = vmatprep.mubr.f32.mxu0 0.0
          %586 = vmatmul.mubr.f32.gmra.mrb[0].mxu0 %v450
          %v587 = vpop.f32.mrb[0].mxu0
          %v588 = vadd.f32 %v499, %v587
          %v589 = vpop.f32.mrb[0].mxu0
          %590 = vmatprep.mubr.f32.mxu0 0.0
          %591 = vmatmul.mubr.f32.gmra.mrb[0].mxu0 %v451
          %v592 = vpop.f32.mrb[0].mxu0
          %v593 = vadd.f32 %v499, %v592
          %v594 = vpop.f32.mrb[0].mxu0
          %595 = vmatprep.mubr.f32.mxu0 0.0
          %596 = vmatmul.mubr.f32.gmra.mrb[0].mxu0 %v452
          %v597 = vpop.f32.mrb[0].mxu0
          %v598 = vadd.f32 %v499, %v597
          %v599 = vpop.f32.mrb[0].mxu0
          %600 = vmatprep.mubr.f32.mxu0 0.0
          %601 = vmatmul.mubr.f32.gmra.mrb[0].mxu0 %v453
          %v602 = vpop.f32.mrb[0].mxu0
          %v603 = vadd.f32 %v499, %v602
          %v604 = vpop.f32.mrb[0].mxu0
          %605 = vmatprep.mubr.f32.mxu0 0.0
          %606 = vmatmul.mubr.f32.gmra.mrb[0].mxu0 %v454
          %v607 = vpop.f32.mrb[0].mxu0
          %v608 = vadd.f32 %v499, %v607
          %v609 = vpop.f32.mrb[0].mxu0
          %610 = vmatprep.mubr.f32.mxu0 0.0
          %611 = vmatmul.mubr.f32.gmra.mrb[0].mxu0 %v455
          %v612 = vpop.f32.mrb[0].mxu0
          %v613 = vadd.f32 %v499, %v612
          %v614 = vpop.f32.mrb[0].mxu0
          %615 = vmatprep.mubr.f32.mxu0 0.0
          %616 = vmatmul.mubr.f32.gmra.mrb[0].mxu0 %v456
          %v617 = vpop.f32.mrb[0].mxu0
          %v618 = vadd.f32 %v499, %v617
          %v619 = vpop.f32.mrb[0].mxu0
          %620 = vmatprep.mubr.f32.mxu0 0.0
          %621 = vmatmul.mubr.f32.gmra.mrb[0].mxu0 %v457
          %v622 = vpop.f32.mrb[0].mxu0
          %v623 = vadd.f32 %v499, %v622
          %v624 = vpop.f32.mrb[0].mxu0
          %625 = vmatprep.mubr.f32.mxu0 0.0
          %626 = vmatmul.mubr.f32.gmra.mrb[0].mxu0 %v458
          %v627 = vpop.f32.mrb[0].mxu0
          %v628 = vadd.f32 %v499, %v627
          %v629 = vpop.f32.mrb[0].mxu0
          %630 = vmatprep.mubr.f32.mxu0 0.0
          %631 = vmatmul.mubr.f32.gmra.mrb[0].mxu0 %v459
          %v632 = vpop.f32.mrb[0].mxu0
          %v633 = vadd.f32 %v499, %v632
          %v634 = vpop.f32.mrb[0].mxu0
          %635 = vmatprep.mubr.f32.mxu0 0.0
          %636 = vmatmul.mubr.f32.gmra.mrb[0].mxu0 %v460
          %v637 = vpop.f32.mrb[0].mxu0
          %v638 = vadd.f32 %v499, %v637
          %v639 = vpop.f32.mrb[0].mxu0
          %640 = vmatprep.mubr.f32.mxu0 0.0
          %641 = vmatmul.mubr.f32.gmra.mrb[0].mxu0 %v461
          %v642 = vpop.f32.mrb[0].mxu0
          %v643 = vadd.f32 %v499, %v642
          %v644 = vpop.f32.mrb[0].mxu0
          %645 = vmatprep.mubr.f32.mxu0 0.0
          %646 = vmatmul.mubr.f32.gmra.mrb[0].mxu0 %v462
          %v647 = vpop.f32.mrb[0].mxu0
          %v648 = vadd.f32 %v499, %v647
          %v649 = vpop.f32.mrb[0].mxu0
          %650 = vmatprep.mubr.f32.mxu0 0.0
          %651 = vmatmul.mubr.f32.gmra.mrb[0].mxu0 %v463
          %v652 = vpop.f32.mrb[0].mxu0
          %v653 = vadd.f32 %v499, %v652
          %v654 = vpop.f32.mrb[0].mxu0
          %655 = vmatprep.mubr.f32.mxu0 0.0
          %656 = vmatmul.mubr.f32.gmra.mrb[0].mxu0 %v464
          %v657 = vpop.f32.mrb[0].mxu0
          %v658 = vadd.f32 %v499, %v657
          %v659 = vpop.f32.mrb[0].mxu0
          %660 = vmatprep.mubr.f32.mxu0 0.0
          %661 = vmatmul.mubr.f32.gmra.mrb[0].mxu0 %v465
          %v662 = vpop.f32.mrb[0].mxu0
          %v663 = vadd.f32 %v499, %v662
          %v664 = vpop.f32.mrb[0].mxu0
          %665 = vmatprep.mubr.f32.mxu0 0.0
          %666 = vmatmul.mubr.f32.gmra.mrb[0].mxu0 %v466
          %v667 = vpop.f32.mrb[0].mxu0
          %v668 = vadd.f32 %v499, %v667
          %v669 = vpop.f32.mrb[0].mxu0
          %670 = vmatprep.mubr.f32.mxu0 0.0
          %671 = vmatmul.mubr.f32.gmra.mrb[0].mxu0 %v467
          %v672 = vpop.f32.mrb[0].mxu0
          %v673 = vadd.f32 %v499, %v672
          %v674 = vpop.f32.mrb[0].mxu0
          %675 = vmatprep.mubr.f32.mxu0 0.0
          %676 = vmatmul.mubr.f32.gmra.mrb[0].mxu0 %v468
          %v677 = vpop.f32.mrb[0].mxu0
          %v678 = vadd.f32 %v499, %v677
          %v679 = vpop.f32.mrb[0].mxu0
          %680 = vmatprep.mubr.f32.mxu0 0.0
          %681 = vmatmul.mubr.f32.gmra.mrb[0].mxu0 %v469
          %v682 = vpop.f32.mrb[0].mxu0
          %v683 = vadd.f32 %v499, %v682
          %v684 = vpop.f32.mrb[0].mxu0
          %685 = vmatprep.mubr.f32.mxu0 0.0
          %686 = vmatmul.mubr.f32.gmra.mrb[0].mxu0 %v470
          %v687 = vpop.f32.mrb[0].mxu0
          %v688 = vadd.f32 %v499, %v687
          %v689 = vpop.f32.mrb[0].mxu0
          %690 = vmatprep.mubr.f32.mxu0 0.0
          %691 = vmatmul.mubr.f32.gmra.mrb[0].mxu0 %v471
          %v692 = vpop.f32.mrb[0].mxu0
          %v693 = vadd.f32 %v499, %v692
          %v694 = vpop.f32.mrb[0].mxu0
          %695 = vmatprep.mubr.f32.mxu0 0.0
          %696 = vmatmul.mubr.f32.gmra.mrb[0].mxu0 %v472
          %v697 = vpop.f32.mrb[0].mxu0
          %v698 = vadd.f32 %v499, %v697
          %v699 = vpop.f32.mrb[0].mxu0
          %700 = vmatprep.mubr.f32.mxu0 0.0
          %701 = vmatmul.mubr.f32.gmra.mrb[0].mxu0 %v473
          %v702 = vpop.f32.mrb[0].mxu0
          %v703 = vadd.f32 %v499, %v702
          %v704 = vpop.f32.mrb[0].mxu0
          %705 = vmatprep.mubr.f32.mxu0 0.0
          %706 = vmatmul.mubr.f32.gmra.mrb[0].mxu0 %v474
          %v707 = vpop.f32.mrb[0].mxu0
          %v708 = vadd.f32 %v499, %v707
          %v709 = vpop.f32.mrb[0].mxu0
          %710 = vmatprep.mubr.f32.mxu0 0.0
          %711 = vmatmul.mubr.f32.gmra.mrb[0].mxu0 %v475
          %v712 = vpop.f32.mrb[0].mxu0
          %v713 = vadd.f32 %v499, %v712
          %v714 = vpop.f32.mrb[0].mxu0
          %715 = vmatprep.mubr.f32.mxu0 0.0
          %716 = vmatmul.mubr.f32.gmra.mrb[0].mxu0 %v476
          %v717 = vpop.f32.mrb[0].mxu0
          %v718 = vadd.f32 %v499, %v717
          %v719 = vpop.f32.mrb[0].mxu0
          %720 = vmatprep.mubr.f32.mxu0 0.0
          %721 = vmatmul.mubr.f32.gmra.mrb[0].mxu0 %v477
          %v722 = vpop.f32.mrb[0].mxu0
          %v723 = vadd.f32 %v499, %v722
          %v724 = vpop.f32.mrb[0].mxu0
          %725 = vdwg.mxu0
          %726 = vst [vmem:[%s391] sm:$0xff] %v568
          %727 = vst [vmem:[%s391 + $0x8] sm:$0xff] %v573
          %728 = vst [vmem:[%s391 + $0x10] sm:$0xff] %v578
          %729 = vst [vmem:[%s391 + $0x18] sm:$0xff] %v583
          %730 = vst [vmem:[%s391 + $0x20] sm:$0xff] %v588
          %731 = vst [vmem:[%s391 + $0x28] sm:$0xff] %v593
          %732 = vst [vmem:[%s391 + $0x30] sm:$0xff] %v598
          %733 = vst [vmem:[%s391 + $0x38] sm:$0xff] %v603
          %734 = vst [vmem:[%s391 + $0x40] sm:$0xff] %v608
          %735 = vst [vmem:[%s391 + $0x48] sm:$0xff] %v613
          %736 = vst [vmem:[%s391 + $0x50] sm:$0xff] %v618
          %737 = vst [vmem:[%s391 + $0x58] sm:$0xff] %v623
          %738 = vst [vmem:[%s391 + $0x60] sm:$0xff] %v628
          %739 = vst [vmem:[%s391 + $0x68] sm:$0xff] %v633
          %740 = vst [vmem:[%s391 + $0x70] sm:$0xff] %v638
          %741 = vst [vmem:[%s391 + $0x78] sm:$0xff] %v643
          %742 = vst [vmem:[%s391 + $0x80] sm:$0xff] %v648
          %743 = vst [vmem:[%s391 + $0x88] sm:$0xff] %v653
          %744 = vst [vmem:[%s391 + $0x90] sm:$0xff] %v658
          %745 = vst [vmem:[%s391 + $0x98] sm:$0xff] %v663
          %746 = vst [vmem:[%s391 + $0xa0] sm:$0xff] %v668
          %747 = vst [vmem:[%s391 + $0xa8] sm:$0xff] %v673
          %748 = vst [vmem:[%s391 + $0xb0] sm:$0xff] %v678
          %749 = vst [vmem:[%s391 + $0xb8] sm:$0xff] %v683
          %750 = vst [vmem:[%s391 + $0xc0] sm:$0xff] %v688
          %751 = vst [vmem:[%s391 + $0xc8] sm:$0xff] %v693
          %752 = vst [vmem:[%s391 + $0xd0] sm:$0xff] %v698
          %753 = vst [vmem:[%s391 + $0xd8] sm:$0xff] %v703
          %754 = vst [vmem:[%s391 + $0xe0] sm:$0xff] %v708
          %755 = vst [vmem:[%s391 + $0xe8] sm:$0xff] %v713
          %756 = vst [vmem:[%s391 + $0xf0] sm:$0xff] %v718
          %757 = vst [vmem:[%s391 + $0xf8] sm:$0xff] %v723
        $region68: #{tpu_custom_call.1} parent=43 // pred_fallthru
          _
        %v758 = vld [vmem:[%s328] sm:$0xff]
        %v759 = vld [vmem:[%s328 + $0x8] sm:$0xff]
        %v760 = vld [vmem:[%s328 + $0x10] sm:$0xff]
        %v761 = vld [vmem:[%s328 + $0x18] sm:$0xff]
        %v762 = vld [vmem:[%s328 + $0x20] sm:$0xff]
        %v763 = vld [vmem:[%s328 + $0x28] sm:$0xff]
        %v764 = vld [vmem:[%s328 + $0x30] sm:$0xff]
        %v765 = vld [vmem:[%s328 + $0x38] sm:$0xff]
        %v766 = vld [vmem:[%s328 + $0x40] sm:$0xff]
        %v767 = vld [vmem:[%s328 + $0x48] sm:$0xff]
        %v768 = vld [vmem:[%s328 + $0x50] sm:$0xff]
        %v769 = vld [vmem:[%s328 + $0x58] sm:$0xff]
        %v770 = vld [vmem:[%s328 + $0x60] sm:$0xff]
        %v771 = vld [vmem:[%s328 + $0x68] sm:$0xff]
        %v772 = vld [vmem:[%s328 + $0x70] sm:$0xff]
        %v773 = vld [vmem:[%s328 + $0x78] sm:$0xff]
        %v774 = vld [vmem:[%s328 + $0x80] sm:$0xff]
        %v775 = vld [vmem:[%s328 + $0x88] sm:$0xff]
        %v776 = vld [vmem:[%s328 + $0x90] sm:$0xff]
        %v777 = vld [vmem:[%s328 + $0x98] sm:$0xff]
        %v778 = vld [vmem:[%s328 + $0xa0] sm:$0xff]
        %v779 = vld [vmem:[%s328 + $0xa8] sm:$0xff]
        %v780 = vld [vmem:[%s328 + $0xb0] sm:$0xff]
        %v781 = vld [vmem:[%s328 + $0xb8] sm:$0xff]
        %v782 = vld [vmem:[%s328 + $0xc0] sm:$0xff]
        %v783 = vld [vmem:[%s328 + $0xc8] sm:$0xff]
        %v784 = vld [vmem:[%s328 + $0xd0] sm:$0xff]
        %v785 = vld [vmem:[%s328 + $0xd8] sm:$0xff]
        %v786 = vld [vmem:[%s328 + $0xe0] sm:$0xff]
        %v787 = vld [vmem:[%s328 + $0xe8] sm:$0xff]
        %v788 = vld [vmem:[%s328 + $0xf0] sm:$0xff]
        %v789 = vld [vmem:[%s328 + $0xf8] sm:$0xff]
        %v790 = vld [vmem:[%s328 + $0x100] sm:$0xff]
        %v791 = vld [vmem:[%s328 + $0x108] sm:$0xff]
        %v792 = vld [vmem:[%s328 + $0x110] sm:$0xff]
        %v793 = vld [vmem:[%s328 + $0x118] sm:$0xff]
        %v794 = vld [vmem:[%s328 + $0x120] sm:$0xff]
        %v795 = vld [vmem:[%s328 + $0x128] sm:$0xff]
        %v796 = vld [vmem:[%s328 + $0x130] sm:$0xff]
        %v797 = vld [vmem:[%s328 + $0x138] sm:$0xff]
        %v798 = vld [vmem:[%s328 + $0x140] sm:$0xff]
        %v799 = vld [vmem:[%s328 + $0x148] sm:$0xff]
        %v800 = vld [vmem:[%s328 + $0x150] sm:$0xff]
        %v801 = vld [vmem:[%s328 + $0x158] sm:$0xff]
        %v802 = vld [vmem:[%s328 + $0x160] sm:$0xff]
        %v803 = vld [vmem:[%s328 + $0x168] sm:$0xff]
        %v804 = vld [vmem:[%s328 + $0x170] sm:$0xff]
        %v805 = vld [vmem:[%s328 + $0x178] sm:$0xff]
        %v806 = vld [vmem:[%s328 + $0x180] sm:$0xff]
        %v807 = vld [vmem:[%s328 + $0x188] sm:$0xff]
        %v808 = vld [vmem:[%s328 + $0x190] sm:$0xff]
        %v809 = vld [vmem:[%s328 + $0x198] sm:$0xff]
        %v810 = vld [vmem:[%s328 + $0x1a0] sm:$0xff]
        %v811 = vld [vmem:[%s328 + $0x1a8] sm:$0xff]
        %v812 = vld [vmem:[%s328 + $0x1b0] sm:$0xff]
        %v813 = vld [vmem:[%s328 + $0x1b8] sm:$0xff]
        %v814 = vld [vmem:[%s328 + $0x1c0] sm:$0xff]
        %v815 = vld [vmem:[%s328 + $0x1c8] sm:$0xff]
        %v816 = vld [vmem:[%s328 + $0x1d0] sm:$0xff]
        %v817 = vld [vmem:[%s328 + $0x1d8] sm:$0xff]
        %v818 = vld [vmem:[%s328 + $0x1e0] sm:$0xff]
        %v819 = vld [vmem:[%s328 + $0x1e8] sm:$0xff]
        %v820 = vld [vmem:[%s328 + $0x1f0] sm:$0xff]
        %v821 = vld [vmem:[%s328 + $0x1f8] sm:$0xff]
        %v822 = vld [vmem:[#allocation5] sm:$0xf]
        %v823 = vld [vmem:[#allocation5 + $0x4] sm:$0xf]
        %v824 = vld [vmem:[#allocation5 + $0x8] sm:$0xf]
        %v825 = vld [vmem:[#allocation5 + $0xc] sm:$0xf]
        %v826 = vld [vmem:[#allocation5 + $0x10] sm:$0xf]
        %v827 = vld [vmem:[#allocation5 + $0x14] sm:$0xf]
        %v828 = vld [vmem:[#allocation5 + $0x18] sm:$0xf]
        %v829 = vld [vmem:[#allocation5 + $0x1c] sm:$0xf]
        %v830 = vld [vmem:[#allocation5 + $0x20] sm:$0xf]
        %v831 = vld [vmem:[#allocation5 + $0x24] sm:$0xf]
        %v832 = vld [vmem:[#allocation5 + $0x28] sm:$0xf]
        %v833 = vld [vmem:[#allocation5 + $0x2c] sm:$0xf]
        %v834 = vld [vmem:[#allocation5 + $0x30] sm:$0xf]
        %v835 = vld [vmem:[#allocation5 + $0x34] sm:$0xf]
        %v836 = vld [vmem:[#allocation5 + $0x38] sm:$0xf]
        %v837 = vld [vmem:[#allocation5 + $0x3c] sm:$0xf]
        %v838 = vld [vmem:[#allocation5 + $0x40] sm:$0xf]
        %v839 = vld [vmem:[#allocation5 + $0x44] sm:$0xf]
        %v840 = vld [vmem:[#allocation5 + $0x48] sm:$0xf]
        %v841 = vld [vmem:[#allocation5 + $0x4c] sm:$0xf]
        %v842 = vld [vmem:[#allocation5 + $0x50] sm:$0xf]
        %v843 = vld [vmem:[#allocation5 + $0x54] sm:$0xf]
        %v844 = vld [vmem:[#allocation5 + $0x58] sm:$0xf]
        %v845 = vld [vmem:[#allocation5 + $0x5c] sm:$0xf]
        %v846 = vld [vmem:[#allocation5 + $0x60] sm:$0xf]
        %v847 = vld [vmem:[#allocation5 + $0x64] sm:$0xf]
        %v848 = vld [vmem:[#allocation5 + $0x68] sm:$0xf]
        %v849 = vld [vmem:[#allocation5 + $0x6c] sm:$0xf]
        %v850 = vld [vmem:[#allocation5 + $0x70] sm:$0xf]
        %v851 = vld [vmem:[#allocation5 + $0x74] sm:$0xf]
        %v852 = vld [vmem:[#allocation5 + $0x78] sm:$0xf]
        %v853 = vld [vmem:[#allocation5 + $0x7c] sm:$0xf]
        %v854 = vld [vmem:[#allocation5 + $0x80] sm:$0xf]
        %v855 = vld [vmem:[#allocation5 + $0x84] sm:$0xf]
        %v856 = vld [vmem:[#allocation5 + $0x88] sm:$0xf]
        %v857 = vld [vmem:[#allocation5 + $0x8c] sm:$0xf]
        %v858 = vld [vmem:[#allocation5 + $0x90] sm:$0xf]
        %v859 = vld [vmem:[#allocation5 + $0x94] sm:$0xf]
        %v860 = vld [vmem:[#allocation5 + $0x98] sm:$0xf]
        %v861 = vld [vmem:[#allocation5 + $0x9c] sm:$0xf]
        %v862 = vld [vmem:[#allocation5 + $0xa0] sm:$0xf]
        %v863 = vld [vmem:[#allocation5 + $0xa4] sm:$0xf]
        %v864 = vld [vmem:[#allocation5 + $0xa8] sm:$0xf]
        %v865 = vld [vmem:[#allocation5 + $0xac] sm:$0xf]
        %v866 = vld [vmem:[#allocation5 + $0xb0] sm:$0xf]
        %v867 = vld [vmem:[#allocation5 + $0xb4] sm:$0xf]
        %v868 = vld [vmem:[#allocation5 + $0xb8] sm:$0xf]
        %v869 = vld [vmem:[#allocation5 + $0xbc] sm:$0xf]
        %v870 = vld [vmem:[#allocation5 + $0xc0] sm:$0xf]
        %v871 = vld [vmem:[#allocation5 + $0xc4] sm:$0xf]
        %v872 = vld [vmem:[#allocation5 + $0xc8] sm:$0xf]
        %v873 = vld [vmem:[#allocation5 + $0xcc] sm:$0xf]
        %v874 = vld [vmem:[#allocation5 + $0xd0] sm:$0xf]
        %v875 = vld [vmem:[#allocation5 + $0xd4] sm:$0xf]
        %v876 = vld [vmem:[#allocation5 + $0xd8] sm:$0xf]
        %v877 = vld [vmem:[#allocation5 + $0xdc] sm:$0xf]
        %v878 = vld [vmem:[#allocation5 + $0xe0] sm:$0xf]
        %v879 = vld [vmem:[#allocation5 + $0xe4] sm:$0xf]
        %v880 = vld [vmem:[#allocation5 + $0xe8] sm:$0xf]
        %v881 = vld [vmem:[#allocation5 + $0xec] sm:$0xf]
        %v882 = vld [vmem:[#allocation5 + $0xf0] sm:$0xf]
        %v883 = vld [vmem:[#allocation5 + $0xf4] sm:$0xf]
        %v884 = vld [vmem:[#allocation5 + $0xf8] sm:$0xf]
        %v885 = vld [vmem:[#allocation5 + $0xfc] sm:$0xf]
        %v950 = vunpack.c.l.b16 %v758
        %v951 = vunpack.c.h.b16 %v758
        %v952 = vunpack.c.l.b16 %v759
        %v953 = vunpack.c.h.b16 %v759
        %v954 = vunpack.c.l.b16 %v760
        %v955 = vunpack.c.h.b16 %v760
        %v956 = vunpack.c.l.b16 %v761
        %v957 = vunpack.c.h.b16 %v761
        %v958 = vunpack.c.l.b16 %v762
        %v959 = vunpack.c.h.b16 %v762
        %v960 = vunpack.c.l.b16 %v763
        %v961 = vunpack.c.h.b16 %v763
        %v962 = vunpack.c.l.b16 %v764
        %v963 = vunpack.c.h.b16 %v764
        %v964 = vunpack.c.l.b16 %v765
        %v965 = vunpack.c.h.b16 %v765
        %v966 = vunpack.c.l.b16 %v766
        %v967 = vunpack.c.h.b16 %v766
        %v968 = vunpack.c.l.b16 %v767
        %v969 = vunpack.c.h.b16 %v767
        %v970 = vunpack.c.l.b16 %v768
        %v971 = vunpack.c.h.b16 %v768
        %v972 = vunpack.c.l.b16 %v769
        %v973 = vunpack.c.h.b16 %v769
        %v974 = vunpack.c.l.b16 %v770
        %v975 = vunpack.c.h.b16 %v770
        %v976 = vunpack.c.l.b16 %v771
        %v977 = vunpack.c.h.b16 %v771
        %v978 = vunpack.c.l.b16 %v772
        %v979 = vunpack.c.h.b16 %v772
        %v980 = vunpack.c.l.b16 %v773
        %v981 = vunpack.c.h.b16 %v773
        %v982 = vunpack.c.l.b16 %v774
        %v983 = vunpack.c.h.b16 %v774
        %v984 = vunpack.c.l.b16 %v775
        %v985 = vunpack.c.h.b16 %v775
        %v986 = vunpack.c.l.b16 %v776
        %v987 = vunpack.c.h.b16 %v776
        %v988 = vunpack.c.l.b16 %v777
        %v989 = vunpack.c.h.b16 %v777
        %v990 = vunpack.c.l.b16 %v778
        %v991 = vunpack.c.h.b16 %v778
        %v992 = vunpack.c.l.b16 %v779
        %v993 = vunpack.c.h.b16 %v779
        %v994 = vunpack.c.l.b16 %v780
        %v995 = vunpack.c.h.b16 %v780
        %v996 = vunpack.c.l.b16 %v781
        %v997 = vunpack.c.h.b16 %v781
        %v998 = vunpack.c.l.b16 %v782
        %v999 = vunpack.c.h.b16 %v782
        %v1000 = vunpack.c.l.b16 %v783
        %v1001 = vunpack.c.h.b16 %v783
        %v1002 = vunpack.c.l.b16 %v784
        %v1003 = vunpack.c.h.b16 %v784
        %v1004 = vunpack.c.l.b16 %v785
        %v1005 = vunpack.c.h.b16 %v785
        %v1006 = vunpack.c.l.b16 %v786
        %v1007 = vunpack.c.h.b16 %v786
        %v1008 = vunpack.c.l.b16 %v787
        %v1009 = vunpack.c.h.b16 %v787
        %v1010 = vunpack.c.l.b16 %v788
        %v1011 = vunpack.c.h.b16 %v788
        %v1012 = vunpack.c.l.b16 %v789
        %v1013 = vunpack.c.h.b16 %v789
        %v1014 = vunpack.c.l.b16 %v790
        %v1015 = vunpack.c.h.b16 %v790
        %v1016 = vunpack.c.l.b16 %v791
        %v1017 = vunpack.c.h.b16 %v791
        %v1018 = vunpack.c.l.b16 %v792
        %v1019 = vunpack.c.h.b16 %v792
        %v1020 = vunpack.c.l.b16 %v793
        %v1021 = vunpack.c.h.b16 %v793
        %v1022 = vunpack.c.l.b16 %v794
        %v1023 = vunpack.c.h.b16 %v794
        %v1024 = vunpack.c.l.b16 %v795
        %v1025 = vunpack.c.h.b16 %v795
        %v1026 = vunpack.c.l.b16 %v796
        %v1027 = vunpack.c.h.b16 %v796
        %v1028 = vunpack.c.l.b16 %v797
        %v1029 = vunpack.c.h.b16 %v797
        %v1030 = vunpack.c.l.b16 %v798
        %v1031 = vunpack.c.h.b16 %v798
        %v1032 = vunpack.c.l.b16 %v799
        %v1033 = vunpack.c.h.b16 %v799
        %v1034 = vunpack.c.l.b16 %v800
        %v1035 = vunpack.c.h.b16 %v800
        %v1036 = vunpack.c.l.b16 %v801
        %v1037 = vunpack.c.h.b16 %v801
        %v1038 = vunpack.c.l.b16 %v802
        %v1039 = vunpack.c.h.b16 %v802
        %v1040 = vunpack.c.l.b16 %v803
        %v1041 = vunpack.c.h.b16 %v803
        %v1042 = vunpack.c.l.b16 %v804
        %v1043 = vunpack.c.h.b16 %v804
        %v1044 = vunpack.c.l.b16 %v805
        %v1045 = vunpack.c.h.b16 %v805
        %v1046 = vunpack.c.l.b16 %v806
        %v1047 = vunpack.c.h.b16 %v806
        %v1048 = vunpack.c.l.b16 %v807
        %v1049 = vunpack.c.h.b16 %v807
        %v1050 = vunpack.c.l.b16 %v808
        %v1051 = vunpack.c.h.b16 %v808
        %v1052 = vunpack.c.l.b16 %v809
        %v1053 = vunpack.c.h.b16 %v809
        %v1054 = vunpack.c.l.b16 %v810
        %v1055 = vunpack.c.h.b16 %v810
        %v1056 = vunpack.c.l.b16 %v811
        %v1057 = vunpack.c.h.b16 %v811
        %v1058 = vunpack.c.l.b16 %v812
        %v1059 = vunpack.c.h.b16 %v812
        %v1060 = vunpack.c.l.b16 %v813
        %v1061 = vunpack.c.h.b16 %v813
        %v1062 = vunpack.c.l.b16 %v814
        %v1063 = vunpack.c.h.b16 %v814
        %v1064 = vunpack.c.l.b16 %v815
        %v1065 = vunpack.c.h.b16 %v815
        %v1066 = vunpack.c.l.b16 %v816
        %v1067 = vunpack.c.h.b16 %v816
        %v1068 = vunpack.c.l.b16 %v817
        %v1069 = vunpack.c.h.b16 %v817
        %v1070 = vunpack.c.l.b16 %v818
        %v1071 = vunpack.c.h.b16 %v818
        %v1072 = vunpack.c.l.b16 %v819
        %v1073 = vunpack.c.h.b16 %v819
        %v1074 = vunpack.c.l.b16 %v820
        %v1075 = vunpack.c.h.b16 %v820
        %v1076 = vunpack.c.l.b16 %v821
        %v1077 = vunpack.c.h.b16 %v821
        %v1078 = vpack.c.b16 %v954, %v950
        %v1079 = vpack.c.b16 %v955, %v951
        %v1080 = vpack.c.b16 %v956, %v952
        %v1081 = vpack.c.b16 %v957, %v953
        %v1082 = vpack.c.b16 %v962, %v958
        %v1083 = vpack.c.b16 %v963, %v959
        %v1084 = vpack.c.b16 %v964, %v960
        %v1085 = vpack.c.b16 %v965, %v961
        %v1086 = vpack.c.b16 %v970, %v966
        %v1087 = vpack.c.b16 %v971, %v967
        %v1088 = vpack.c.b16 %v972, %v968
        %v1089 = vpack.c.b16 %v973, %v969
        %v1090 = vpack.c.b16 %v978, %v974
        %v1091 = vpack.c.b16 %v979, %v975
        %v1092 = vpack.c.b16 %v980, %v976
        %v1093 = vpack.c.b16 %v981, %v977
        %v1094 = vpack.c.b16 %v986, %v982
        %v1095 = vpack.c.b16 %v987, %v983
        %v1096 = vpack.c.b16 %v988, %v984
        %v1097 = vpack.c.b16 %v989, %v985
        %v1098 = vpack.c.b16 %v994, %v990
        %v1099 = vpack.c.b16 %v995, %v991
        %v1100 = vpack.c.b16 %v996, %v992
        %v1101 = vpack.c.b16 %v997, %v993
        %v1102 = vpack.c.b16 %v1002, %v998
        %v1103 = vpack.c.b16 %v1003, %v999
        %v1104 = vpack.c.b16 %v1004, %v1000
        %v1105 = vpack.c.b16 %v1005, %v1001
        %v1106 = vpack.c.b16 %v1010, %v1006
        %v1107 = vpack.c.b16 %v1011, %v1007
        %v1108 = vpack.c.b16 %v1012, %v1008
        %v1109 = vpack.c.b16 %v1013, %v1009
        %v1110 = vpack.c.b16 %v1018, %v1014
        %v1111 = vpack.c.b16 %v1019, %v1015
        %v1112 = vpack.c.b16 %v1020, %v1016
        %v1113 = vpack.c.b16 %v1021, %v1017
        %v1114 = vpack.c.b16 %v1026, %v1022
        %v1115 = vpack.c.b16 %v1027, %v1023
        %v1116 = vpack.c.b16 %v1028, %v1024
        %v1117 = vpack.c.b16 %v1029, %v1025
        %v1118 = vpack.c.b16 %v1034, %v1030
        %v1119 = vpack.c.b16 %v1035, %v1031
        %v1120 = vpack.c.b16 %v1036, %v1032
        %v1121 = vpack.c.b16 %v1037, %v1033
        %v1122 = vpack.c.b16 %v1042, %v1038
        %v1123 = vpack.c.b16 %v1043, %v1039
        %v1124 = vpack.c.b16 %v1044, %v1040
        %v1125 = vpack.c.b16 %v1045, %v1041
        %v1126 = vpack.c.b16 %v1050, %v1046
        %v1127 = vpack.c.b16 %v1051, %v1047
        %v1128 = vpack.c.b16 %v1052, %v1048
        %v1129 = vpack.c.b16 %v1053, %v1049
        %v1130 = vpack.c.b16 %v1058, %v1054
        %v1131 = vpack.c.b16 %v1059, %v1055
        %v1132 = vpack.c.b16 %v1060, %v1056
        %v1133 = vpack.c.b16 %v1061, %v1057
        %v1134 = vpack.c.b16 %v1066, %v1062
        %v1135 = vpack.c.b16 %v1067, %v1063
        %v1136 = vpack.c.b16 %v1068, %v1064
        %v1137 = vpack.c.b16 %v1069, %v1065
        %v1138 = vpack.c.b16 %v1074, %v1070
        %v1139 = vpack.c.b16 %v1075, %v1071
        %v1140 = vpack.c.b16 %v1076, %v1072
        %v1141 = vpack.c.b16 %v1077, %v1073
        %v1270 = vunpack.c.l.b16 %v822
        %v1271 = vunpack.c.l.b16 %v823
        %v1272 = vunpack.c.l.b16 %v824
        %v1273 = vunpack.c.l.b16 %v825
        %v1274 = vunpack.c.l.b16 %v826
        %v1275 = vunpack.c.l.b16 %v827
        %v1276 = vunpack.c.l.b16 %v828
        %v1277 = vunpack.c.l.b16 %v829
        %v1278 = vunpack.c.l.b16 %v830
        %v1279 = vunpack.c.l.b16 %v831
        %v1280 = vunpack.c.l.b16 %v832
        %v1281 = vunpack.c.l.b16 %v833
        %v1282 = vunpack.c.l.b16 %v834
        %v1283 = vunpack.c.l.b16 %v835
        %v1284 = vunpack.c.l.b16 %v836
        %v1285 = vunpack.c.l.b16 %v837
        %v1286 = vunpack.c.l.b16 %v838
        %v1287 = vunpack.c.l.b16 %v839
        %v1288 = vunpack.c.l.b16 %v840
        %v1289 = vunpack.c.l.b16 %v841
        %v1290 = vunpack.c.l.b16 %v842
        %v1291 = vunpack.c.l.b16 %v843
        %v1292 = vunpack.c.l.b16 %v844
        %v1293 = vunpack.c.l.b16 %v845
        %v1294 = vunpack.c.l.b16 %v846
        %v1295 = vunpack.c.l.b16 %v847
        %v1296 = vunpack.c.l.b16 %v848
        %v1297 = vunpack.c.l.b16 %v849
        %v1298 = vunpack.c.l.b16 %v850
        %v1299 = vunpack.c.l.b16 %v851
        %v1300 = vunpack.c.l.b16 %v852
        %v1301 = vunpack.c.l.b16 %v853
        %v1302 = vunpack.c.l.b16 %v854
        %v1303 = vunpack.c.l.b16 %v855
        %v1304 = vunpack.c.l.b16 %v856
        %v1305 = vunpack.c.l.b16 %v857
        %v1306 = vunpack.c.l.b16 %v858
        %v1307 = vunpack.c.l.b16 %v859
        %v1308 = vunpack.c.l.b16 %v860
        %v1309 = vunpack.c.l.b16 %v861
        %v1310 = vunpack.c.l.b16 %v862
        %v1311 = vunpack.c.l.b16 %v863
        %v1312 = vunpack.c.l.b16 %v864
        %v1313 = vunpack.c.l.b16 %v865
        %v1314 = vunpack.c.l.b16 %v866
        %v1315 = vunpack.c.l.b16 %v867
        %v1316 = vunpack.c.l.b16 %v868
        %v1317 = vunpack.c.l.b16 %v869
        %v1318 = vunpack.c.l.b16 %v870
        %v1319 = vunpack.c.l.b16 %v871
        %v1320 = vunpack.c.l.b16 %v872
        %v1321 = vunpack.c.l.b16 %v873
        %v1322 = vunpack.c.l.b16 %v874
        %v1323 = vunpack.c.l.b16 %v875
        %v1324 = vunpack.c.l.b16 %v876
        %v1325 = vunpack.c.l.b16 %v877
        %v1326 = vunpack.c.l.b16 %v878
        %v1327 = vunpack.c.l.b16 %v879
        %v1328 = vunpack.c.l.b16 %v880
        %v1329 = vunpack.c.l.b16 %v881
        %v1330 = vunpack.c.l.b16 %v882
        %v1331 = vunpack.c.l.b16 %v883
        %v1332 = vunpack.c.l.b16 %v884
        %v1333 = vunpack.c.l.b16 %v885
        %v1334 = vpack.c.b16 %v1271, %v1270
        %v1335 = vpack.c.b16 %v1273, %v1272
        %v1336 = vpack.c.b16 %v1275, %v1274
        %v1337 = vpack.c.b16 %v1277, %v1276
        %v1338 = vpack.c.b16 %v1279, %v1278
        %v1339 = vpack.c.b16 %v1281, %v1280
        %v1340 = vpack.c.b16 %v1283, %v1282
        %v1341 = vpack.c.b16 %v1285, %v1284
        %v1342 = vpack.c.b16 %v1287, %v1286
        %v1343 = vpack.c.b16 %v1289, %v1288
        %v1344 = vpack.c.b16 %v1291, %v1290
        %v1345 = vpack.c.b16 %v1293, %v1292
        %v1346 = vpack.c.b16 %v1295, %v1294
        %v1347 = vpack.c.b16 %v1297, %v1296
        %v1348 = vpack.c.b16 %v1299, %v1298
        %v1349 = vpack.c.b16 %v1301, %v1300
        %v1350 = vpack.c.b16 %v1303, %v1302
        %v1351 = vpack.c.b16 %v1305, %v1304
        %v1352 = vpack.c.b16 %v1307, %v1306
        %v1353 = vpack.c.b16 %v1309, %v1308
        %v1354 = vpack.c.b16 %v1311, %v1310
        %v1355 = vpack.c.b16 %v1313, %v1312
        %v1356 = vpack.c.b16 %v1315, %v1314
        %v1357 = vpack.c.b16 %v1317, %v1316
        %v1358 = vpack.c.b16 %v1319, %v1318
        %v1359 = vpack.c.b16 %v1321, %v1320
        %v1360 = vpack.c.b16 %v1323, %v1322
        %v1361 = vpack.c.b16 %v1325, %v1324
        %v1362 = vpack.c.b16 %v1327, %v1326
        %v1363 = vpack.c.b16 %v1329, %v1328
        %v1364 = vpack.c.b16 %v1331, %v1330
        %v1365 = vpack.c.b16 %v1333, %v1332
        %1398 = vmatprep.subr.bf16.mxu0 0
        %1399 = vmatpush1.bf16.msra.mxu0 %v1334
        %1400 = vmatprep.subr.bf16.mxu0 0
        %1401 = vmatpush1.bf16.msra.mxu0 %v1335
        %1402 = vmatprep.subr.bf16.mxu0 0
        %1403 = vmatpush1.bf16.msra.mxu0 %v1336
        %1404 = vmatprep.subr.bf16.mxu0 0
        %1405 = vmatpush1.bf16.msra.mxu0 %v1337
        %1406 = vmatprep.subr.bf16.mxu0 0
        %1407 = vmatpush1.bf16.msra.mxu0 %v1338
        %1408 = vmatprep.subr.bf16.mxu0 0
        %1409 = vmatpush1.bf16.msra.mxu0 %v1339
        %1410 = vmatprep.subr.bf16.mxu0 0
        %1411 = vmatpush1.bf16.msra.mxu0 %v1340
        %1412 = vmatprep.subr.bf16.mxu0 0
        %1413 = vmatpush1.bf16.msra.mxu0 %v1341
        %1414 = vmatprep.subr.bf16.mxu0 0
        %1415 = vmatpush1.bf16.msra.mxu0 %v1342
        %1416 = vmatprep.subr.bf16.mxu0 0
        %1417 = vmatpush1.bf16.msra.mxu0 %v1343
        %1418 = vmatprep.subr.bf16.mxu0 0
        %1419 = vmatpush1.bf16.msra.mxu0 %v1344
        %1420 = vmatprep.subr.bf16.mxu0 0
        %1421 = vmatpush1.bf16.msra.mxu0 %v1345
        %1422 = vmatprep.subr.bf16.mxu0 0
        %1423 = vmatpush1.bf16.msra.mxu0 %v1346
        %1424 = vmatprep.subr.bf16.mxu0 0
        %1425 = vmatpush1.bf16.msra.mxu0 %v1347
        %1426 = vmatprep.subr.bf16.mxu0 0
        %1427 = vmatpush1.bf16.msra.mxu0 %v1348
        %1428 = vmatprep.subr.bf16.mxu0 0
        %1429 = vmatpush1.bf16.msra.mxu0 %v1349
        %1430 = vmatprep.mubr.bf16.mxu0 %v1079
        %1431 = vmatmul.mubr.bf16.gmra.mrb[0].mxu0 %v1078
        %v1432 = vpop.f32.mrb[0].mxu0
        %v1433 = vadd.f32 0.0, %v1432
        %v1434 = vpop.f32.mrb[0].mxu0
        %v1435 = vpop.f32.mrb[0].mxu0
        %v1436 = vadd.f32 0.0, %v1435
        %v1437 = vpop.f32.mrb[0].mxu0
        %1438 = vmatprep.mubr.bf16.mxu0 %v1083
        %1439 = vmatmul.mubr.bf16.gmra.mrb[0].mxu0 %v1082
        %v1440 = vpop.f32.mrb[0].mxu0
        %v1441 = vadd.f32 0.0, %v1440
        %v1442 = vpop.f32.mrb[0].mxu0
        %v1443 = vpop.f32.mrb[0].mxu0
        %v1444 = vadd.f32 0.0, %v1443
        %v1445 = vpop.f32.mrb[0].mxu0
        %1446 = vmatprep.mubr.bf16.mxu0 %v1087
        %1447 = vmatmul.mubr.bf16.gmra.mrb[0].mxu0 %v1086
        %v1448 = vpop.f32.mrb[0].mxu0
        %v1449 = vadd.f32 0.0, %v1448
        %v1450 = vpop.f32.mrb[0].mxu0
        %v1451 = vpop.f32.mrb[0].mxu0
        %v1452 = vadd.f32 0.0, %v1451
        %v1453 = vpop.f32.mrb[0].mxu0
        %1454 = vmatprep.mubr.bf16.mxu0 %v1091
        %1455 = vmatmul.mubr.bf16.gmra.mrb[0].mxu0 %v1090
        %v1456 = vpop.f32.mrb[0].mxu0
        %v1457 = vadd.f32 0.0, %v1456
        %v1458 = vpop.f32.mrb[0].mxu0
        %v1459 = vpop.f32.mrb[0].mxu0
        %v1460 = vadd.f32 0.0, %v1459
        %v1461 = vpop.f32.mrb[0].mxu0
        %1462 = vmatprep.mubr.bf16.mxu0 %v1095
        %1463 = vmatmul.mubr.bf16.gmra.mrb[0].mxu0 %v1094
        %v1464 = vpop.f32.mrb[0].mxu0
        %v1465 = vadd.f32 0.0, %v1464
        %v1466 = vpop.f32.mrb[0].mxu0
        %v1467 = vpop.f32.mrb[0].mxu0
        %v1468 = vadd.f32 0.0, %v1467
        %v1469 = vpop.f32.mrb[0].mxu0
        %1470 = vmatprep.mubr.bf16.mxu0 %v1099
        %1471 = vmatmul.mubr.bf16.gmra.mrb[0].mxu0 %v1098
        %v1472 = vpop.f32.mrb[0].mxu0
        %v1473 = vadd.f32 0.0, %v1472
        %v1474 = vpop.f32.mrb[0].mxu0
        %v1475 = vpop.f32.mrb[0].mxu0
        %v1476 = vadd.f32 0.0, %v1475
        %v1477 = vpop.f32.mrb[0].mxu0
        %1478 = vmatprep.mubr.bf16.mxu0 %v1103
        %1479 = vmatmul.mubr.bf16.gmra.mrb[0].mxu0 %v1102
        %v1480 = vpop.f32.mrb[0].mxu0
        %v1481 = vadd.f32 0.0, %v1480
        %v1482 = vpop.f32.mrb[0].mxu0
        %v1483 = vpop.f32.mrb[0].mxu0
        %v1484 = vadd.f32 0.0, %v1483
        %v1485 = vpop.f32.mrb[0].mxu0
        %1486 = vmatprep.mubr.bf16.mxu0 %v1107
        %1487 = vmatmul.mubr.bf16.gmra.mrb[0].mxu0 %v1106
        %v1488 = vpop.f32.mrb[0].mxu0
        %v1489 = vadd.f32 0.0, %v1488
        %v1490 = vpop.f32.mrb[0].mxu0
        %v1491 = vpop.f32.mrb[0].mxu0
        %v1492 = vadd.f32 0.0, %v1491
        %v1493 = vpop.f32.mrb[0].mxu0
        %1494 = vmatprep.mubr.bf16.mxu0 %v1111
        %1495 = vmatmul.mubr.bf16.gmra.mrb[0].mxu0 %v1110
        %v1496 = vpop.f32.mrb[0].mxu0
        %v1497 = vadd.f32 0.0, %v1496
        %v1498 = vpop.f32.mrb[0].mxu0
        %v1499 = vpop.f32.mrb[0].mxu0
        %v1500 = vadd.f32 0.0, %v1499
        %v1501 = vpop.f32.mrb[0].mxu0
        %1502 = vmatprep.mubr.bf16.mxu0 %v1115
        %1503 = vmatmul.mubr.bf16.gmra.mrb[0].mxu0 %v1114
        %v1504 = vpop.f32.mrb[0].mxu0
        %v1505 = vadd.f32 0.0, %v1504
        %v1506 = vpop.f32.mrb[0].mxu0
        %v1507 = vpop.f32.mrb[0].mxu0
        %v1508 = vadd.f32 0.0, %v1507
        %v1509 = vpop.f32.mrb[0].mxu0
        %1510 = vmatprep.mubr.bf16.mxu0 %v1119
        %1511 = vmatmul.mubr.bf16.gmra.mrb[0].mxu0 %v1118
        %v1512 = vpop.f32.mrb[0].mxu0
        %v1513 = vadd.f32 0.0, %v1512
        %v1514 = vpop.f32.mrb[0].mxu0
        %v1515 = vpop.f32.mrb[0].mxu0
        %v1516 = vadd.f32 0.0, %v1515
        %v1517 = vpop.f32.mrb[0].mxu0
        %1518 = vmatprep.mubr.bf16.mxu0 %v1123
        %1519 = vmatmul.mubr.bf16.gmra.mrb[0].mxu0 %v1122
        %v1520 = vpop.f32.mrb[0].mxu0
        %v1521 = vadd.f32 0.0, %v1520
        %v1522 = vpop.f32.mrb[0].mxu0
        %v1523 = vpop.f32.mrb[0].mxu0
        %v1524 = vadd.f32 0.0, %v1523
        %v1525 = vpop.f32.mrb[0].mxu0
        %1526 = vmatprep.mubr.bf16.mxu0 %v1127
        %1527 = vmatmul.mubr.bf16.gmra.mrb[0].mxu0 %v1126
        %v1528 = vpop.f32.mrb[0].mxu0
        %v1529 = vadd.f32 0.0, %v1528
        %v1530 = vpop.f32.mrb[0].mxu0
        %v1531 = vpop.f32.mrb[0].mxu0
        %v1532 = vadd.f32 0.0, %v1531
        %v1533 = vpop.f32.mrb[0].mxu0
        %1534 = vmatprep.mubr.bf16.mxu0 %v1131
        %1535 = vmatmul.mubr.bf16.gmra.mrb[0].mxu0 %v1130
        %v1536 = vpop.f32.mrb[0].mxu0
        %v1537 = vadd.f32 0.0, %v1536
        %v1538 = vpop.f32.mrb[0].mxu0
        %v1539 = vpop.f32.mrb[0].mxu0
        %v1540 = vadd.f32 0.0, %v1539
        %v1541 = vpop.f32.mrb[0].mxu0
        %1542 = vmatprep.mubr.bf16.mxu0 %v1135
        %1543 = vmatmul.mubr.bf16.gmra.mrb[0].mxu0 %v1134
        %v1544 = vpop.f32.mrb[0].mxu0
        %v1545 = vadd.f32 0.0, %v1544
        %v1546 = vpop.f32.mrb[0].mxu0
        %v1547 = vpop.f32.mrb[0].mxu0
        %v1548 = vadd.f32 0.0, %v1547
        %v1549 = vpop.f32.mrb[0].mxu0
        %1550 = vmatprep.mubr.bf16.mxu0 %v1139
        %1551 = vmatmul.mubr.bf16.gmra.mrb[0].mxu0 %v1138
        %v1552 = vpop.f32.mrb[0].mxu0
        %v1553 = vadd.f32 0.0, %v1552
        %v1554 = vpop.f32.mrb[0].mxu0
        %v1555 = vpop.f32.mrb[0].mxu0
        %v1556 = vadd.f32 0.0, %v1555
        %v1557 = vpop.f32.mrb[0].mxu0
        %1558 = vdwg.mxu0
        %1559 = vmatprep.subr.bf16.mxu0 0
        %1560 = vmatpush1.bf16.msra.mxu0 %v1350
        %1561 = vmatprep.subr.bf16.mxu0 0
        %1562 = vmatpush1.bf16.msra.mxu0 %v1351
        %1563 = vmatprep.subr.bf16.mxu0 0
        %1564 = vmatpush1.bf16.msra.mxu0 %v1352
        %1565 = vmatprep.subr.bf16.mxu0 0
        %1566 = vmatpush1.bf16.msra.mxu0 %v1353
        %1567 = vmatprep.subr.bf16.mxu0 0
        %1568 = vmatpush1.bf16.msra.mxu0 %v1354
        %1569 = vmatprep.subr.bf16.mxu0 0
        %1570 = vmatpush1.bf16.msra.mxu0 %v1355
        %1571 = vmatprep.subr.bf16.mxu0 0
        %1572 = vmatpush1.bf16.msra.mxu0 %v1356
        %1573 = vmatprep.subr.bf16.mxu0 0
        %1574 = vmatpush1.bf16.msra.mxu0 %v1357
        %1575 = vmatprep.subr.bf16.mxu0 0
        %1576 = vmatpush1.bf16.msra.mxu0 %v1358
        %1577 = vmatprep.subr.bf16.mxu0 0
        %1578 = vmatpush1.bf16.msra.mxu0 %v1359
        %1579 = vmatprep.subr.bf16.mxu0 0
        %1580 = vmatpush1.bf16.msra.mxu0 %v1360
        %1581 = vmatprep.subr.bf16.mxu0 0
        %1582 = vmatpush1.bf16.msra.mxu0 %v1361
        %1583 = vmatprep.subr.bf16.mxu0 0
        %1584 = vmatpush1.bf16.msra.mxu0 %v1362
        %1585 = vmatprep.subr.bf16.mxu0 0
        %1586 = vmatpush1.bf16.msra.mxu0 %v1363
        %1587 = vmatprep.subr.bf16.mxu0 0
        %1588 = vmatpush1.bf16.msra.mxu0 %v1364
        %1589 = vmatprep.subr.bf16.mxu0 0
        %1590 = vmatpush1.bf16.msra.mxu0 %v1365
        %1591 = vmatprep.mubr.bf16.mxu0 %v1081
        %1592 = vmatmul.mubr.bf16.gmra.mrb[0].mxu0 %v1080
        %v1593 = vpop.f32.mrb[0].mxu0
        %v1594 = vadd.f32 %v1433, %v1593
        %v1595 = vpop.f32.mrb[0].mxu0
        %v1596 = vpop.f32.mrb[0].mxu0
        %v1597 = vadd.f32 %v1436, %v1596
        %v1598 = vpop.f32.mrb[0].mxu0
        %1599 = vmatprep.mubr.bf16.mxu0 %v1085
        %1600 = vmatmul.mubr.bf16.gmra.mrb[0].mxu0 %v1084
        %v1601 = vpop.f32.mrb[0].mxu0
        %v1602 = vadd.f32 %v1441, %v1601
        %v1603 = vpop.f32.mrb[0].mxu0
        %v1604 = vpop.f32.mrb[0].mxu0
        %v1605 = vadd.f32 %v1444, %v1604
        %v1606 = vpop.f32.mrb[0].mxu0
        %1607 = vmatprep.mubr.bf16.mxu0 %v1089
        %1608 = vmatmul.mubr.bf16.gmra.mrb[0].mxu0 %v1088
        %v1609 = vpop.f32.mrb[0].mxu0
        %v1610 = vadd.f32 %v1449, %v1609
        %v1611 = vpop.f32.mrb[0].mxu0
        %v1612 = vpop.f32.mrb[0].mxu0
        %v1613 = vadd.f32 %v1452, %v1612
        %v1614 = vpop.f32.mrb[0].mxu0
        %1615 = vmatprep.mubr.bf16.mxu0 %v1093
        %1616 = vmatmul.mubr.bf16.gmra.mrb[0].mxu0 %v1092
        %v1617 = vpop.f32.mrb[0].mxu0
        %v1618 = vadd.f32 %v1457, %v1617
        %v1619 = vpop.f32.mrb[0].mxu0
        %v1620 = vpop.f32.mrb[0].mxu0
        %v1621 = vadd.f32 %v1460, %v1620
        %v1622 = vpop.f32.mrb[0].mxu0
        %1623 = vmatprep.mubr.bf16.mxu0 %v1097
        %1624 = vmatmul.mubr.bf16.gmra.mrb[0].mxu0 %v1096
        %v1625 = vpop.f32.mrb[0].mxu0
        %v1626 = vadd.f32 %v1465, %v1625
        %v1627 = vpop.f32.mrb[0].mxu0
        %v1628 = vpop.f32.mrb[0].mxu0
        %v1629 = vadd.f32 %v1468, %v1628
        %v1630 = vpop.f32.mrb[0].mxu0
        %1631 = vmatprep.mubr.bf16.mxu0 %v1101
        %1632 = vmatmul.mubr.bf16.gmra.mrb[0].mxu0 %v1100
        %v1633 = vpop.f32.mrb[0].mxu0
        %v1634 = vadd.f32 %v1473, %v1633
        %v1635 = vpop.f32.mrb[0].mxu0
        %v1636 = vpop.f32.mrb[0].mxu0
        %v1637 = vadd.f32 %v1476, %v1636
        %v1638 = vpop.f32.mrb[0].mxu0
        %1639 = vmatprep.mubr.bf16.mxu0 %v1105
        %1640 = vmatmul.mubr.bf16.gmra.mrb[0].mxu0 %v1104
        %v1641 = vpop.f32.mrb[0].mxu0
        %v1642 = vadd.f32 %v1481, %v1641
        %v1643 = vpop.f32.mrb[0].mxu0
        %v1644 = vpop.f32.mrb[0].mxu0
        %v1645 = vadd.f32 %v1484, %v1644
        %v1646 = vpop.f32.mrb[0].mxu0
        %1647 = vmatprep.mubr.bf16.mxu0 %v1109
        %1648 = vmatmul.mubr.bf16.gmra.mrb[0].mxu0 %v1108
        %v1649 = vpop.f32.mrb[0].mxu0
        %v1650 = vadd.f32 %v1489, %v1649
        %v1651 = vpop.f32.mrb[0].mxu0
        %v1652 = vpop.f32.mrb[0].mxu0
        %v1653 = vadd.f32 %v1492, %v1652
        %v1654 = vpop.f32.mrb[0].mxu0
        %1655 = vmatprep.mubr.bf16.mxu0 %v1113
        %1656 = vmatmul.mubr.bf16.gmra.mrb[0].mxu0 %v1112
        %v1657 = vpop.f32.mrb[0].mxu0
        %v1658 = vadd.f32 %v1497, %v1657
        %v1659 = vpop.f32.mrb[0].mxu0
        %v1660 = vpop.f32.mrb[0].mxu0
        %v1661 = vadd.f32 %v1500, %v1660
        %v1662 = vpop.f32.mrb[0].mxu0
        %1663 = vmatprep.mubr.bf16.mxu0 %v1117
        %1664 = vmatmul.mubr.bf16.gmra.mrb[0].mxu0 %v1116
        %v1665 = vpop.f32.mrb[0].mxu0
        %v1666 = vadd.f32 %v1505, %v1665
        %v1667 = vpop.f32.mrb[0].mxu0
        %v1668 = vpop.f32.mrb[0].mxu0
        %v1669 = vadd.f32 %v1508, %v1668
        %v1670 = vpop.f32.mrb[0].mxu0
        %1671 = vmatprep.mubr.bf16.mxu0 %v1121
        %1672 = vmatmul.mubr.bf16.gmra.mrb[0].mxu0 %v1120
        %v1673 = vpop.f32.mrb[0].mxu0
        %v1674 = vadd.f32 %v1513, %v1673
        %v1675 = vpop.f32.mrb[0].mxu0
        %v1676 = vpop.f32.mrb[0].mxu0
        %v1677 = vadd.f32 %v1516, %v1676
        %v1678 = vpop.f32.mrb[0].mxu0
        %1679 = vmatprep.mubr.bf16.mxu0 %v1125
        %1680 = vmatmul.mubr.bf16.gmra.mrb[0].mxu0 %v1124
        %v1681 = vpop.f32.mrb[0].mxu0
        %v1682 = vadd.f32 %v1521, %v1681
        %v1683 = vpop.f32.mrb[0].mxu0
        %v1684 = vpop.f32.mrb[0].mxu0
        %v1685 = vadd.f32 %v1524, %v1684
        %v1686 = vpop.f32.mrb[0].mxu0
        %1687 = vmatprep.mubr.bf16.mxu0 %v1129
        %1688 = vmatmul.mubr.bf16.gmra.mrb[0].mxu0 %v1128
        %v1689 = vpop.f32.mrb[0].mxu0
        %v1690 = vadd.f32 %v1529, %v1689
        %v1691 = vpop.f32.mrb[0].mxu0
        %v1692 = vpop.f32.mrb[0].mxu0
        %v1693 = vadd.f32 %v1532, %v1692
        %v1694 = vpop.f32.mrb[0].mxu0
        %1695 = vmatprep.mubr.bf16.mxu0 %v1133
        %1696 = vmatmul.mubr.bf16.gmra.mrb[0].mxu0 %v1132
        %v1697 = vpop.f32.mrb[0].mxu0
        %v1698 = vadd.f32 %v1537, %v1697
        %v1699 = vpop.f32.mrb[0].mxu0
        %v1700 = vpop.f32.mrb[0].mxu0
        %v1701 = vadd.f32 %v1540, %v1700
        %v1702 = vpop.f32.mrb[0].mxu0
        %1703 = vmatprep.mubr.bf16.mxu0 %v1137
        %1704 = vmatmul.mubr.bf16.gmra.mrb[0].mxu0 %v1136
        %v1705 = vpop.f32.mrb[0].mxu0
        %v1706 = vadd.f32 %v1545, %v1705
        %v1707 = vpop.f32.mrb[0].mxu0
        %v1708 = vpop.f32.mrb[0].mxu0
        %v1709 = vadd.f32 %v1548, %v1708
        %v1710 = vpop.f32.mrb[0].mxu0
        %1711 = vmatprep.mubr.bf16.mxu0 %v1141
        %1712 = vmatmul.mubr.bf16.gmra.mrb[0].mxu0 %v1140
        %v1713 = vpop.f32.mrb[0].mxu0
        %v1714 = vadd.f32 %v1553, %v1713
        %v1715 = vpop.f32.mrb[0].mxu0
        %v1716 = vpop.f32.mrb[0].mxu0
        %v1717 = vadd.f32 %v1556, %v1716
        %v1718 = vpop.f32.mrb[0].mxu0
        %1719 = vdwg.mxu0
        %v1720 = vld [vmem:[%s401] sm:$0xff]
        %v1721 = vld [vmem:[%s401 + $0x8] sm:$0xff]
        %v1722 = vld [vmem:[%s401 + $0x10] sm:$0xff]
        %v1723 = vld [vmem:[%s401 + $0x18] sm:$0xff]
        %v1724 = vld [vmem:[%s401 + $0x20] sm:$0xff]
        %v1725 = vld [vmem:[%s401 + $0x28] sm:$0xff]
        %v1726 = vld [vmem:[%s401 + $0x30] sm:$0xff]
        %v1727 = vld [vmem:[%s401 + $0x38] sm:$0xff]
        %v1728 = vld [vmem:[%s401 + $0x40] sm:$0xff]
        %v1729 = vld [vmem:[%s401 + $0x48] sm:$0xff]
        %v1730 = vld [vmem:[%s401 + $0x50] sm:$0xff]
        %v1731 = vld [vmem:[%s401 + $0x58] sm:$0xff]
        %v1732 = vld [vmem:[%s401 + $0x60] sm:$0xff]
        %v1733 = vld [vmem:[%s401 + $0x68] sm:$0xff]
        %v1734 = vld [vmem:[%s401 + $0x70] sm:$0xff]
        %v1735 = vld [vmem:[%s401 + $0x78] sm:$0xff]
        %v1736 = vld [vmem:[%s401 + $0x80] sm:$0xff]
        %v1737 = vld [vmem:[%s401 + $0x88] sm:$0xff]
        %v1738 = vld [vmem:[%s401 + $0x90] sm:$0xff]
        %v1739 = vld [vmem:[%s401 + $0x98] sm:$0xff]
        %v1740 = vld [vmem:[%s401 + $0xa0] sm:$0xff]
        %v1741 = vld [vmem:[%s401 + $0xa8] sm:$0xff]
        %v1742 = vld [vmem:[%s401 + $0xb0] sm:$0xff]
        %v1743 = vld [vmem:[%s401 + $0xb8] sm:$0xff]
        %v1744 = vld [vmem:[%s401 + $0xc0] sm:$0xff]
        %v1745 = vld [vmem:[%s401 + $0xc8] sm:$0xff]
        %v1746 = vld [vmem:[%s401 + $0xd0] sm:$0xff]
        %v1747 = vld [vmem:[%s401 + $0xd8] sm:$0xff]
        %v1748 = vld [vmem:[%s401 + $0xe0] sm:$0xff]
        %v1749 = vld [vmem:[%s401 + $0xe8] sm:$0xff]
        %v1750 = vld [vmem:[%s401 + $0xf0] sm:$0xff]
        %v1751 = vld [vmem:[%s401 + $0xf8] sm:$0xff]
        %1753 = vset.pattern.permute.xlu0 0
        %1754 = vperm.xlu0 %1753, %v1720
        %v1755 = vpop.permute.xlu0 %1754
        %1758 = vset.pattern.permute.xlu0 0
        %1759 = vperm.xlu0 %1758, %v1721
        %v1760 = vpop.permute.xlu0 %1759
        %1763 = vset.pattern.permute.xlu0 0
        %1764 = vperm.xlu0 %1763, %v1722
        %v1765 = vpop.permute.xlu0 %1764
        %1768 = vset.pattern.permute.xlu0 0
        %1769 = vperm.xlu0 %1768, %v1723
        %v1770 = vpop.permute.xlu0 %1769
        %1773 = vset.pattern.permute.xlu0 0
        %1774 = vperm.xlu0 %1773, %v1724
        %v1775 = vpop.permute.xlu0 %1774
        %1778 = vset.pattern.permute.xlu0 0
        %1779 = vperm.xlu0 %1778, %v1725
        %v1780 = vpop.permute.xlu0 %1779
        %1783 = vset.pattern.permute.xlu0 0
        %1784 = vperm.xlu0 %1783, %v1726
        %v1785 = vpop.permute.xlu0 %1784
        %1788 = vset.pattern.permute.xlu0 0
        %1789 = vperm.xlu0 %1788, %v1727
        %v1790 = vpop.permute.xlu0 %1789
        %1793 = vset.pattern.permute.xlu0 0
        %1794 = vperm.xlu0 %1793, %v1728
        %v1795 = vpop.permute.xlu0 %1794
        %1798 = vset.pattern.permute.xlu0 0
        %1799 = vperm.xlu0 %1798, %v1729
        %v1800 = vpop.permute.xlu0 %1799
        %1803 = vset.pattern.permute.xlu0 0
        %1804 = vperm.xlu0 %1803, %v1730
        %v1805 = vpop.permute.xlu0 %1804
        %1808 = vset.pattern.permute.xlu0 0
        %1809 = vperm.xlu0 %1808, %v1731
        %v1810 = vpop.permute.xlu0 %1809
        %1813 = vset.pattern.permute.xlu0 0
        %1814 = vperm.xlu0 %1813, %v1732
        %v1815 = vpop.permute.xlu0 %1814
        %1818 = vset.pattern.permute.xlu0 0
        %1819 = vperm.xlu0 %1818, %v1733
        %v1820 = vpop.permute.xlu0 %1819
        %1823 = vset.pattern.permute.xlu0 0
        %1824 = vperm.xlu0 %1823, %v1734
        %v1825 = vpop.permute.xlu0 %1824
        %1828 = vset.pattern.permute.xlu0 0
        %1829 = vperm.xlu0 %1828, %v1735
        %v1830 = vpop.permute.xlu0 %1829
        %1833 = vset.pattern.permute.xlu0 0
        %1834 = vperm.xlu0 %1833, %v1736
        %v1835 = vpop.permute.xlu0 %1834
        %1838 = vset.pattern.permute.xlu0 0
        %1839 = vperm.xlu0 %1838, %v1737
        %v1840 = vpop.permute.xlu0 %1839
        %1843 = vset.pattern.permute.xlu0 0
        %1844 = vperm.xlu0 %1843, %v1738
        %v1845 = vpop.permute.xlu0 %1844
        %1848 = vset.pattern.permute.xlu0 0
        %1849 = vperm.xlu0 %1848, %v1739
        %v1850 = vpop.permute.xlu0 %1849
        %1853 = vset.pattern.permute.xlu0 0
        %1854 = vperm.xlu0 %1853, %v1740
        %v1855 = vpop.permute.xlu0 %1854
        %1858 = vset.pattern.permute.xlu0 0
        %1859 = vperm.xlu0 %1858, %v1741
        %v1860 = vpop.permute.xlu0 %1859
        %1863 = vset.pattern.permute.xlu0 0
        %1864 = vperm.xlu0 %1863, %v1742
        %v1865 = vpop.permute.xlu0 %1864
        %1868 = vset.pattern.permute.xlu0 0
        %1869 = vperm.xlu0 %1868, %v1743
        %v1870 = vpop.permute.xlu0 %1869
        %1873 = vset.pattern.permute.xlu0 0
        %1874 = vperm.xlu0 %1873, %v1744
        %v1875 = vpop.permute.xlu0 %1874
        %1878 = vset.pattern.permute.xlu0 0
        %1879 = vperm.xlu0 %1878, %v1745
        %v1880 = vpop.permute.xlu0 %1879
        %1883 = vset.pattern.permute.xlu0 0
        %1884 = vperm.xlu0 %1883, %v1746
        %v1885 = vpop.permute.xlu0 %1884
        %1888 = vset.pattern.permute.xlu0 0
        %1889 = vperm.xlu0 %1888, %v1747
        %v1890 = vpop.permute.xlu0 %1889
        %1893 = vset.pattern.permute.xlu0 0
        %1894 = vperm.xlu0 %1893, %v1748
        %v1895 = vpop.permute.xlu0 %1894
        %1898 = vset.pattern.permute.xlu0 0
        %1899 = vperm.xlu0 %1898, %v1749
        %v1900 = vpop.permute.xlu0 %1899
        %1903 = vset.pattern.permute.xlu0 0
        %1904 = vperm.xlu0 %1903, %v1750
        %v1905 = vpop.permute.xlu0 %1904
        %1908 = vset.pattern.permute.xlu0 0
        %1909 = vperm.xlu0 %1908, %v1751
        %v1910 = vpop.permute.xlu0 %1909
        %v1912 = vmul.f32 %v1594, %v1755
        %v1913 = vmul.f32 %v1597, %v1760
        %v1914 = vmul.f32 %v1602, %v1765
        %v1915 = vmul.f32 %v1605, %v1770
        %v1916 = vmul.f32 %v1610, %v1775
        %v1917 = vmul.f32 %v1613, %v1780
        %v1918 = vmul.f32 %v1618, %v1785
        %v1919 = vmul.f32 %v1621, %v1790
        %v1920 = vmul.f32 %v1626, %v1795
        %v1921 = vmul.f32 %v1629, %v1800
        %v1922 = vmul.f32 %v1634, %v1805
        %v1923 = vmul.f32 %v1637, %v1810
        %v1924 = vmul.f32 %v1642, %v1815
        %v1925 = vmul.f32 %v1645, %v1820
        %v1926 = vmul.f32 %v1650, %v1825
        %v1927 = vmul.f32 %v1653, %v1830
        %v1928 = vmul.f32 %v1658, %v1835
        %v1929 = vmul.f32 %v1661, %v1840
        %v1930 = vmul.f32 %v1666, %v1845
        %v1931 = vmul.f32 %v1669, %v1850
        %v1932 = vmul.f32 %v1674, %v1855
        %v1933 = vmul.f32 %v1677, %v1860
        %v1934 = vmul.f32 %v1682, %v1865
        %v1935 = vmul.f32 %v1685, %v1870
        %v1936 = vmul.f32 %v1690, %v1875
        %v1937 = vmul.f32 %v1693, %v1880
        %v1938 = vmul.f32 %v1698, %v1885
        %v1939 = vmul.f32 %v1701, %v1890
        %v1940 = vmul.f32 %v1706, %v1895
        %v1941 = vmul.f32 %v1709, %v1900
        %v1942 = vmul.f32 %v1714, %v1905
        %v1943 = vmul.f32 %v1717, %v1910
        %v1944 = vld [vmem:[%s391] sm:$0xff]
        %v1945 = vld [vmem:[%s391 + $0x8] sm:$0xff]
        %v1946 = vld [vmem:[%s391 + $0x10] sm:$0xff]
        %v1947 = vld [vmem:[%s391 + $0x18] sm:$0xff]
        %v1948 = vld [vmem:[%s391 + $0x20] sm:$0xff]
        %v1949 = vld [vmem:[%s391 + $0x28] sm:$0xff]
        %v1950 = vld [vmem:[%s391 + $0x30] sm:$0xff]
        %v1951 = vld [vmem:[%s391 + $0x38] sm:$0xff]
        %v1952 = vld [vmem:[%s391 + $0x40] sm:$0xff]
        %v1953 = vld [vmem:[%s391 + $0x48] sm:$0xff]
        %v1954 = vld [vmem:[%s391 + $0x50] sm:$0xff]
        %v1955 = vld [vmem:[%s391 + $0x58] sm:$0xff]
        %v1956 = vld [vmem:[%s391 + $0x60] sm:$0xff]
        %v1957 = vld [vmem:[%s391 + $0x68] sm:$0xff]
        %v1958 = vld [vmem:[%s391 + $0x70] sm:$0xff]
        %v1959 = vld [vmem:[%s391 + $0x78] sm:$0xff]
        %v1960 = vld [vmem:[%s391 + $0x80] sm:$0xff]
        %v1961 = vld [vmem:[%s391 + $0x88] sm:$0xff]
        %v1962 = vld [vmem:[%s391 + $0x90] sm:$0xff]
        %v1963 = vld [vmem:[%s391 + $0x98] sm:$0xff]
        %v1964 = vld [vmem:[%s391 + $0xa0] sm:$0xff]
        %v1965 = vld [vmem:[%s391 + $0xa8] sm:$0xff]
        %v1966 = vld [vmem:[%s391 + $0xb0] sm:$0xff]
        %v1967 = vld [vmem:[%s391 + $0xb8] sm:$0xff]
        %v1968 = vld [vmem:[%s391 + $0xc0] sm:$0xff]
        %v1969 = vld [vmem:[%s391 + $0xc8] sm:$0xff]
        %v1970 = vld [vmem:[%s391 + $0xd0] sm:$0xff]
        %v1971 = vld [vmem:[%s391 + $0xd8] sm:$0xff]
        %v1972 = vld [vmem:[%s391 + $0xe0] sm:$0xff]
        %v1973 = vld [vmem:[%s391 + $0xe8] sm:$0xff]
        %v1974 = vld [vmem:[%s391 + $0xf0] sm:$0xff]
        %v1975 = vld [vmem:[%s391 + $0xf8] sm:$0xff]
        %v1976 = vld [vmem:[%s341] sm:$0xff]
        %v1977 = vld [vmem:[%s341 + $0x8] sm:$0xff]
        %v1978 = vld [vmem:[%s341 + $0x10] sm:$0xff]
        %v1979 = vld [vmem:[%s341 + $0x18] sm:$0xff]
        %v1980 = vld [vmem:[%s341 + $0x20] sm:$0xff]
        %v1981 = vld [vmem:[%s341 + $0x28] sm:$0xff]
        %v1982 = vld [vmem:[%s341 + $0x30] sm:$0xff]
        %v1983 = vld [vmem:[%s341 + $0x38] sm:$0xff]
        %v1984 = vld [vmem:[%s341 + $0x40] sm:$0xff]
        %v1985 = vld [vmem:[%s341 + $0x48] sm:$0xff]
        %v1986 = vld [vmem:[%s341 + $0x50] sm:$0xff]
        %v1987 = vld [vmem:[%s341 + $0x58] sm:$0xff]
        %v1988 = vld [vmem:[%s341 + $0x60] sm:$0xff]
        %v1989 = vld [vmem:[%s341 + $0x68] sm:$0xff]
        %v1990 = vld [vmem:[%s341 + $0x70] sm:$0xff]
        %v1991 = vld [vmem:[%s341 + $0x78] sm:$0xff]
        %1992 = vmatprep.subr.mxu0 0.0
        %1993 = vmatpush1.msra.mxu0 %v1976
        %1994 = vmatprep.subr.mxu0 0.0
        %1995 = vmatpush1.msra.mxu0 %v1977
        %1996 = vmatprep.subr.mxu0 0.0
        %1997 = vmatpush1.msra.mxu0 %v1978
        %1998 = vmatprep.subr.mxu0 0.0
        %1999 = vmatpush1.msra.mxu0 %v1979
        %2000 = vmatprep.subr.mxu0 0.0
        %2001 = vmatpush1.msra.mxu0 %v1980
        %2002 = vmatprep.subr.mxu0 0.0
        %2003 = vmatpush1.msra.mxu0 %v1981
        %2004 = vmatprep.subr.mxu0 0.0
        %2005 = vmatpush1.msra.mxu0 %v1982
        %2006 = vmatprep.subr.mxu0 0.0
        %2007 = vmatpush1.msra.mxu0 %v1983
        %2008 = vmatprep.subr.mxu0 0.0
        %2009 = vmatpush1.msra.mxu0 %v1984
        %2010 = vmatprep.subr.mxu0 0.0
        %2011 = vmatpush1.msra.mxu0 %v1985
        %2012 = vmatprep.subr.mxu0 0.0
        %2013 = vmatpush1.msra.mxu0 %v1986
        %2014 = vmatprep.subr.mxu0 0.0
        %2015 = vmatpush1.msra.mxu0 %v1987
        %2016 = vmatprep.subr.mxu0 0.0
        %2017 = vmatpush1.msra.mxu0 %v1988
        %2018 = vmatprep.subr.mxu0 0.0
        %2019 = vmatpush1.msra.mxu0 %v1989
        %2020 = vmatprep.subr.mxu0 0.0
        %2021 = vmatpush1.msra.mxu0 %v1990
        %2022 = vmatprep.subr.mxu0 0.0
        %2023 = vmatpush1.msra.mxu0 %v1991
        %2024 = vmatprep.subr.mxu0 0.0
        %2025 = vmatpush1.msra.mxu0 0.0
        %2026 = vmatprep.subr.mxu0 0.0
        %2027 = vmatpush1.msra.mxu0 0.0
        %2028 = vmatprep.subr.mxu0 0.0
        %2029 = vmatpush1.msra.mxu0 0.0
        %2030 = vmatprep.subr.mxu0 0.0
        %2031 = vmatpush1.msra.mxu0 0.0
        %2032 = vmatprep.subr.mxu0 0.0
        %2033 = vmatpush1.msra.mxu0 0.0
        %2034 = vmatprep.subr.mxu0 0.0
        %2035 = vmatpush1.msra.mxu0 0.0
        %2036 = vmatprep.subr.mxu0 0.0
        %2037 = vmatpush1.msra.mxu0 0.0
        %2038 = vmatprep.subr.mxu0 0.0
        %2039 = vmatpush1.msra.mxu0 0.0
        %2040 = vmatprep.subr.mxu0 0.0
        %2041 = vmatpush1.msra.mxu0 0.0
        %2042 = vmatprep.subr.mxu0 0.0
        %2043 = vmatpush1.msra.mxu0 0.0
        %2044 = vmatprep.subr.mxu0 0.0
        %2045 = vmatpush1.msra.mxu0 0.0
        %2046 = vmatprep.subr.mxu0 0.0
        %2047 = vmatpush1.msra.mxu0 0.0
        %2048 = vmatprep.subr.mxu0 0.0
        %2049 = vmatpush1.msra.mxu0 0.0
        %2050 = vmatprep.subr.mxu0 0.0
        %2051 = vmatpush1.msra.mxu0 0.0
        %2052 = vmatprep.subr.mxu0 0.0
        %2053 = vmatpush1.msra.mxu0 0.0
        %2054 = vmatprep.subr.mxu0 0.0
        %2055 = vmatpush1.msra.mxu0 0.0
        %2056 = vmatprep.mubr.f32.mxu0 0.0
        %2057 = vmatmul.mubr.f32.gmra.mrb[0].mxu0 %v1912
        %v2058 = vpop.f32.mrb[0].mxu0
        %v2059 = vadd.f32 0.0, %v2058
        %v2060 = vpop.f32.mrb[0].mxu0
        %2061 = vmatprep.mubr.f32.mxu0 0.0
        %2062 = vmatmul.mubr.f32.gmra.mrb[0].mxu0 %v1913
        %v2063 = vpop.f32.mrb[0].mxu0
        %v2064 = vadd.f32 0.0, %v2063
        %v2065 = vpop.f32.mrb[0].mxu0
        %2066 = vmatprep.mubr.f32.mxu0 0.0
        %2067 = vmatmul.mubr.f32.gmra.mrb[0].mxu0 %v1914
        %v2068 = vpop.f32.mrb[0].mxu0
        %v2069 = vadd.f32 0.0, %v2068
        %v2070 = vpop.f32.mrb[0].mxu0
        %2071 = vmatprep.mubr.f32.mxu0 0.0
        %2072 = vmatmul.mubr.f32.gmra.mrb[0].mxu0 %v1915
        %v2073 = vpop.f32.mrb[0].mxu0
        %v2074 = vadd.f32 0.0, %v2073
        %v2075 = vpop.f32.mrb[0].mxu0
        %2076 = vmatprep.mubr.f32.mxu0 0.0
        %2077 = vmatmul.mubr.f32.gmra.mrb[0].mxu0 %v1916
        %v2078 = vpop.f32.mrb[0].mxu0
        %v2079 = vadd.f32 0.0, %v2078
        %v2080 = vpop.f32.mrb[0].mxu0
        %2081 = vmatprep.mubr.f32.mxu0 0.0
        %2082 = vmatmul.mubr.f32.gmra.mrb[0].mxu0 %v1917
        %v2083 = vpop.f32.mrb[0].mxu0
        %v2084 = vadd.f32 0.0, %v2083
        %v2085 = vpop.f32.mrb[0].mxu0
        %2086 = vmatprep.mubr.f32.mxu0 0.0
        %2087 = vmatmul.mubr.f32.gmra.mrb[0].mxu0 %v1918
        %v2088 = vpop.f32.mrb[0].mxu0
        %v2089 = vadd.f32 0.0, %v2088
        %v2090 = vpop.f32.mrb[0].mxu0
        %2091 = vmatprep.mubr.f32.mxu0 0.0
        %2092 = vmatmul.mubr.f32.gmra.mrb[0].mxu0 %v1919
        %v2093 = vpop.f32.mrb[0].mxu0
        %v2094 = vadd.f32 0.0, %v2093
        %v2095 = vpop.f32.mrb[0].mxu0
        %2096 = vmatprep.mubr.f32.mxu0 0.0
        %2097 = vmatmul.mubr.f32.gmra.mrb[0].mxu0 %v1920
        %v2098 = vpop.f32.mrb[0].mxu0
        %v2099 = vadd.f32 0.0, %v2098
        %v2100 = vpop.f32.mrb[0].mxu0
        %2101 = vmatprep.mubr.f32.mxu0 0.0
        %2102 = vmatmul.mubr.f32.gmra.mrb[0].mxu0 %v1921
        %v2103 = vpop.f32.mrb[0].mxu0
        %v2104 = vadd.f32 0.0, %v2103
        %v2105 = vpop.f32.mrb[0].mxu0
        %2106 = vmatprep.mubr.f32.mxu0 0.0
        %2107 = vmatmul.mubr.f32.gmra.mrb[0].mxu0 %v1922
        %v2108 = vpop.f32.mrb[0].mxu0
        %v2109 = vadd.f32 0.0, %v2108
        %v2110 = vpop.f32.mrb[0].mxu0
        %2111 = vmatprep.mubr.f32.mxu0 0.0
        %2112 = vmatmul.mubr.f32.gmra.mrb[0].mxu0 %v1923
        %v2113 = vpop.f32.mrb[0].mxu0
        %v2114 = vadd.f32 0.0, %v2113
        %v2115 = vpop.f32.mrb[0].mxu0
        %2116 = vmatprep.mubr.f32.mxu0 0.0
        %2117 = vmatmul.mubr.f32.gmra.mrb[0].mxu0 %v1924
        %v2118 = vpop.f32.mrb[0].mxu0
        %v2119 = vadd.f32 0.0, %v2118
        %v2120 = vpop.f32.mrb[0].mxu0
        %2121 = vmatprep.mubr.f32.mxu0 0.0
        %2122 = vmatmul.mubr.f32.gmra.mrb[0].mxu0 %v1925
        %v2123 = vpop.f32.mrb[0].mxu0
        %v2124 = vadd.f32 0.0, %v2123
        %v2125 = vpop.f32.mrb[0].mxu0
        %2126 = vmatprep.mubr.f32.mxu0 0.0
        %2127 = vmatmul.mubr.f32.gmra.mrb[0].mxu0 %v1926
        %v2128 = vpop.f32.mrb[0].mxu0
        %v2129 = vadd.f32 0.0, %v2128
        %v2130 = vpop.f32.mrb[0].mxu0
        %2131 = vmatprep.mubr.f32.mxu0 0.0
        %2132 = vmatmul.mubr.f32.gmra.mrb[0].mxu0 %v1927
        %v2133 = vpop.f32.mrb[0].mxu0
        %v2134 = vadd.f32 0.0, %v2133
        %v2135 = vpop.f32.mrb[0].mxu0
        %2136 = vmatprep.mubr.f32.mxu0 0.0
        %2137 = vmatmul.mubr.f32.gmra.mrb[0].mxu0 %v1928
        %v2138 = vpop.f32.mrb[0].mxu0
        %v2139 = vadd.f32 0.0, %v2138
        %v2140 = vpop.f32.mrb[0].mxu0
        %2141 = vmatprep.mubr.f32.mxu0 0.0
        %2142 = vmatmul.mubr.f32.gmra.mrb[0].mxu0 %v1929
        %v2143 = vpop.f32.mrb[0].mxu0
        %v2144 = vadd.f32 0.0, %v2143
        %v2145 = vpop.f32.mrb[0].mxu0
        %2146 = vmatprep.mubr.f32.mxu0 0.0
        %2147 = vmatmul.mubr.f32.gmra.mrb[0].mxu0 %v1930
        %v2148 = vpop.f32.mrb[0].mxu0
        %v2149 = vadd.f32 0.0, %v2148
        %v2150 = vpop.f32.mrb[0].mxu0
        %2151 = vmatprep.mubr.f32.mxu0 0.0
        %2152 = vmatmul.mubr.f32.gmra.mrb[0].mxu0 %v1931
        %v2153 = vpop.f32.mrb[0].mxu0
        %v2154 = vadd.f32 0.0, %v2153
        %v2155 = vpop.f32.mrb[0].mxu0
        %2156 = vmatprep.mubr.f32.mxu0 0.0
        %2157 = vmatmul.mubr.f32.gmra.mrb[0].mxu0 %v1932
        %v2158 = vpop.f32.mrb[0].mxu0
        %v2159 = vadd.f32 0.0, %v2158
        %v2160 = vpop.f32.mrb[0].mxu0
        %2161 = vmatprep.mubr.f32.mxu0 0.0
        %2162 = vmatmul.mubr.f32.gmra.mrb[0].mxu0 %v1933
        %v2163 = vpop.f32.mrb[0].mxu0
        %v2164 = vadd.f32 0.0, %v2163
        %v2165 = vpop.f32.mrb[0].mxu0
        %2166 = vmatprep.mubr.f32.mxu0 0.0
        %2167 = vmatmul.mubr.f32.gmra.mrb[0].mxu0 %v1934
        %v2168 = vpop.f32.mrb[0].mxu0
        %v2169 = vadd.f32 0.0, %v2168
        %v2170 = vpop.f32.mrb[0].mxu0
        %2171 = vmatprep.mubr.f32.mxu0 0.0
        %2172 = vmatmul.mubr.f32.gmra.mrb[0].mxu0 %v1935
        %v2173 = vpop.f32.mrb[0].mxu0
        %v2174 = vadd.f32 0.0, %v2173
        %v2175 = vpop.f32.mrb[0].mxu0
        %2176 = vmatprep.mubr.f32.mxu0 0.0
        %2177 = vmatmul.mubr.f32.gmra.mrb[0].mxu0 %v1936
        %v2178 = vpop.f32.mrb[0].mxu0
        %v2179 = vadd.f32 0.0, %v2178
        %v2180 = vpop.f32.mrb[0].mxu0
        %2181 = vmatprep.mubr.f32.mxu0 0.0
        %2182 = vmatmul.mubr.f32.gmra.mrb[0].mxu0 %v1937
        %v2183 = vpop.f32.mrb[0].mxu0
        %v2184 = vadd.f32 0.0, %v2183
        %v2185 = vpop.f32.mrb[0].mxu0
        %2186 = vmatprep.mubr.f32.mxu0 0.0
        %2187 = vmatmul.mubr.f32.gmra.mrb[0].mxu0 %v1938
        %v2188 = vpop.f32.mrb[0].mxu0
        %v2189 = vadd.f32 0.0, %v2188
        %v2190 = vpop.f32.mrb[0].mxu0
        %2191 = vmatprep.mubr.f32.mxu0 0.0
        %2192 = vmatmul.mubr.f32.gmra.mrb[0].mxu0 %v1939
        %v2193 = vpop.f32.mrb[0].mxu0
        %v2194 = vadd.f32 0.0, %v2193
        %v2195 = vpop.f32.mrb[0].mxu0
        %2196 = vmatprep.mubr.f32.mxu0 0.0
        %2197 = vmatmul.mubr.f32.gmra.mrb[0].mxu0 %v1940
        %v2198 = vpop.f32.mrb[0].mxu0
        %v2199 = vadd.f32 0.0, %v2198
        %v2200 = vpop.f32.mrb[0].mxu0
        %2201 = vmatprep.mubr.f32.mxu0 0.0
        %2202 = vmatmul.mubr.f32.gmra.mrb[0].mxu0 %v1941
        %v2203 = vpop.f32.mrb[0].mxu0
        %v2204 = vadd.f32 0.0, %v2203
        %v2205 = vpop.f32.mrb[0].mxu0
        %2206 = vmatprep.mubr.f32.mxu0 0.0
        %2207 = vmatmul.mubr.f32.gmra.mrb[0].mxu0 %v1942
        %v2208 = vpop.f32.mrb[0].mxu0
        %v2209 = vadd.f32 0.0, %v2208
        %v2210 = vpop.f32.mrb[0].mxu0
        %2211 = vmatprep.mubr.f32.mxu0 0.0
        %2212 = vmatmul.mubr.f32.gmra.mrb[0].mxu0 %v1943
        %v2213 = vpop.f32.mrb[0].mxu0
        %v2214 = vadd.f32 0.0, %v2213
        %v2215 = vpop.f32.mrb[0].mxu0
        %2216 = vdwg.mxu0
        %v2217 = vadd.f32 %v1944, %v2059
        %v2218 = vadd.f32 %v1945, %v2064
        %v2219 = vadd.f32 %v1946, %v2069
        %v2220 = vadd.f32 %v1947, %v2074
        %v2221 = vadd.f32 %v1948, %v2079
        %v2222 = vadd.f32 %v1949, %v2084
        %v2223 = vadd.f32 %v1950, %v2089
        %v2224 = vadd.f32 %v1951, %v2094
        %v2225 = vadd.f32 %v1952, %v2099
        %v2226 = vadd.f32 %v1953, %v2104
        %v2227 = vadd.f32 %v1954, %v2109
        %v2228 = vadd.f32 %v1955, %v2114
        %v2229 = vadd.f32 %v1956, %v2119
        %v2230 = vadd.f32 %v1957, %v2124
        %v2231 = vadd.f32 %v1958, %v2129
        %v2232 = vadd.f32 %v1959, %v2134
        %v2233 = vadd.f32 %v1960, %v2139
        %v2234 = vadd.f32 %v1961, %v2144
        %v2235 = vadd.f32 %v1962, %v2149
        %v2236 = vadd.f32 %v1963, %v2154
        %v2237 = vadd.f32 %v1964, %v2159
        %v2238 = vadd.f32 %v1965, %v2164
        %v2239 = vadd.f32 %v1966, %v2169
        %v2240 = vadd.f32 %v1967, %v2174
        %v2241 = vadd.f32 %v1968, %v2179
        %v2242 = vadd.f32 %v1969, %v2184
        %v2243 = vadd.f32 %v1970, %v2189
        %v2244 = vadd.f32 %v1971, %v2194
        %v2245 = vadd.f32 %v1972, %v2199
        %v2246 = vadd.f32 %v1973, %v2204
        %v2247 = vadd.f32 %v1974, %v2209
        %v2248 = vadd.f32 %v1975, %v2214
        %2249 = vst [vmem:[%s391] sm:$0xff] %v2217
        %2250 = vst [vmem:[%s391 + $0x8] sm:$0xff] %v2218
        %2251 = vst [vmem:[%s391 + $0x10] sm:$0xff] %v2219
        %2252 = vst [vmem:[%s391 + $0x18] sm:$0xff] %v2220
        %2253 = vst [vmem:[%s391 + $0x20] sm:$0xff] %v2221
        %2254 = vst [vmem:[%s391 + $0x28] sm:$0xff] %v2222
        %2255 = vst [vmem:[%s391 + $0x30] sm:$0xff] %v2223
        %2256 = vst [vmem:[%s391 + $0x38] sm:$0xff] %v2224
        %2257 = vst [vmem:[%s391 + $0x40] sm:$0xff] %v2225
        %2258 = vst [vmem:[%s391 + $0x48] sm:$0xff] %v2226
        %2259 = vst [vmem:[%s391 + $0x50] sm:$0xff] %v2227
        %2260 = vst [vmem:[%s391 + $0x58] sm:$0xff] %v2228
        %2261 = vst [vmem:[%s391 + $0x60] sm:$0xff] %v2229
        %2262 = vst [vmem:[%s391 + $0x68] sm:$0xff] %v2230
        %2263 = vst [vmem:[%s391 + $0x70] sm:$0xff] %v2231
        %2264 = vst [vmem:[%s391 + $0x78] sm:$0xff] %v2232
        %2265 = vst [vmem:[%s391 + $0x80] sm:$0xff] %v2233
        %2266 = vst [vmem:[%s391 + $0x88] sm:$0xff] %v2234
        %2267 = vst [vmem:[%s391 + $0x90] sm:$0xff] %v2235
        %2268 = vst [vmem:[%s391 + $0x98] sm:$0xff] %v2236
        %2269 = vst [vmem:[%s391 + $0xa0] sm:$0xff] %v2237
        %2270 = vst [vmem:[%s391 + $0xa8] sm:$0xff] %v2238
        %2271 = vst [vmem:[%s391 + $0xb0] sm:$0xff] %v2239
        %2272 = vst [vmem:[%s391 + $0xb8] sm:$0xff] %v2240
        %2273 = vst [vmem:[%s391 + $0xc0] sm:$0xff] %v2241
        %2274 = vst [vmem:[%s391 + $0xc8] sm:$0xff] %v2242
        %2275 = vst [vmem:[%s391 + $0xd0] sm:$0xff] %v2243
        %2276 = vst [vmem:[%s391 + $0xd8] sm:$0xff] %v2244
        %2277 = vst [vmem:[%s391 + $0xe0] sm:$0xff] %v2245
        %2278 = vst [vmem:[%s391 + $0xe8] sm:$0xff] %v2246
        %2279 = vst [vmem:[%s391 + $0xf0] sm:$0xff] %v2247
        %2280 = vst [vmem:[%s391 + $0xf8] sm:$0xff] %v2248
        %p2281 = scmp.eq.s32.totalorder %s30, 2
        // Predicated region
        $region69: #{tpu_custom_call.1} parent=43 // pred_check
          %p2282 = pneg %p2281
        $region70: #{tpu_custom_call.1} parent=43 // pred_check_branch
          %2284 = sbr.rel (%p2282) target = $region72
        $region71: #{tpu_custom_call.1} parent=43 // pred_region
          %v2285 = vld [vmem:[%s391] sm:$0xff]
          %v2286 = vld [vmem:[%s391 + $0x8] sm:$0xff]
          %v2287 = vld [vmem:[%s391 + $0x10] sm:$0xff]
          %v2288 = vld [vmem:[%s391 + $0x18] sm:$0xff]
          %v2289 = vld [vmem:[%s391 + $0x20] sm:$0xff]
          %v2290 = vld [vmem:[%s391 + $0x28] sm:$0xff]
          %v2291 = vld [vmem:[%s391 + $0x30] sm:$0xff]
          %v2292 = vld [vmem:[%s391 + $0x38] sm:$0xff]
          %v2293 = vld [vmem:[%s391 + $0x40] sm:$0xff]
          %v2294 = vld [vmem:[%s391 + $0x48] sm:$0xff]
          %v2295 = vld [vmem:[%s391 + $0x50] sm:$0xff]
          %v2296 = vld [vmem:[%s391 + $0x58] sm:$0xff]
          %v2297 = vld [vmem:[%s391 + $0x60] sm:$0xff]
          %v2298 = vld [vmem:[%s391 + $0x68] sm:$0xff]
          %v2299 = vld [vmem:[%s391 + $0x70] sm:$0xff]
          %v2300 = vld [vmem:[%s391 + $0x78] sm:$0xff]
          %v2301 = vld [vmem:[%s391 + $0x80] sm:$0xff]
          %v2302 = vld [vmem:[%s391 + $0x88] sm:$0xff]
          %v2303 = vld [vmem:[%s391 + $0x90] sm:$0xff]
          %v2304 = vld [vmem:[%s391 + $0x98] sm:$0xff]
          %v2305 = vld [vmem:[%s391 + $0xa0] sm:$0xff]
          %v2306 = vld [vmem:[%s391 + $0xa8] sm:$0xff]
          %v2307 = vld [vmem:[%s391 + $0xb0] sm:$0xff]
          %v2308 = vld [vmem:[%s391 + $0xb8] sm:$0xff]
          %v2309 = vld [vmem:[%s391 + $0xc0] sm:$0xff]
          %v2310 = vld [vmem:[%s391 + $0xc8] sm:$0xff]
          %v2311 = vld [vmem:[%s391 + $0xd0] sm:$0xff]
          %v2312 = vld [vmem:[%s391 + $0xd8] sm:$0xff]
          %v2313 = vld [vmem:[%s391 + $0xe0] sm:$0xff]
          %v2314 = vld [vmem:[%s391 + $0xe8] sm:$0xff]
          %v2315 = vld [vmem:[%s391 + $0xf0] sm:$0xff]
          %v2316 = vld [vmem:[%s391 + $0xf8] sm:$0xff]
          %v2317 = vmax.f32 %v2285, 0.0
          %v2318 = vmax.f32 %v2286, 0.0
          %v2319 = vmax.f32 %v2287, 0.0
          %v2320 = vmax.f32 %v2288, 0.0
          %v2321 = vmax.f32 %v2289, 0.0
          %v2322 = vmax.f32 %v2290, 0.0
          %v2323 = vmax.f32 %v2291, 0.0
          %v2324 = vmax.f32 %v2292, 0.0
          %v2325 = vmax.f32 %v2293, 0.0
          %v2326 = vmax.f32 %v2294, 0.0
          %v2327 = vmax.f32 %v2295, 0.0
          %v2328 = vmax.f32 %v2296, 0.0
          %v2329 = vmax.f32 %v2297, 0.0
          %v2330 = vmax.f32 %v2298, 0.0
          %v2331 = vmax.f32 %v2299, 0.0
          %v2332 = vmax.f32 %v2300, 0.0
          %v2333 = vmax.f32 %v2301, 0.0
          %v2334 = vmax.f32 %v2302, 0.0
          %v2335 = vmax.f32 %v2303, 0.0
          %v2336 = vmax.f32 %v2304, 0.0
          %v2337 = vmax.f32 %v2305, 0.0
          %v2338 = vmax.f32 %v2306, 0.0
          %v2339 = vmax.f32 %v2307, 0.0
          %v2340 = vmax.f32 %v2308, 0.0
          %v2341 = vmax.f32 %v2309, 0.0
          %v2342 = vmax.f32 %v2310, 0.0
          %v2343 = vmax.f32 %v2311, 0.0
          %v2344 = vmax.f32 %v2312, 0.0
          %v2345 = vmax.f32 %v2313, 0.0
          %v2346 = vmax.f32 %v2314, 0.0
          %v2347 = vmax.f32 %v2315, 0.0
          %v2348 = vmax.f32 %v2316, 0.0
          %2349 = vst [vmem:[%s391] sm:$0xff] %v2317
          %2350 = vst [vmem:[%s391 + $0x8] sm:$0xff] %v2318
          %2351 = vst [vmem:[%s391 + $0x10] sm:$0xff] %v2319
          %2352 = vst [vmem:[%s391 + $0x18] sm:$0xff] %v2320
          %2353 = vst [vmem:[%s391 + $0x20] sm:$0xff] %v2321
          %2354 = vst [vmem:[%s391 + $0x28] sm:$0xff] %v2322
          %2355 = vst [vmem:[%s391 + $0x30] sm:$0xff] %v2323
          %2356 = vst [vmem:[%s391 + $0x38] sm:$0xff] %v2324
          %2357 = vst [vmem:[%s391 + $0x40] sm:$0xff] %v2325
          %2358 = vst [vmem:[%s391 + $0x48] sm:$0xff] %v2326
          %2359 = vst [vmem:[%s391 + $0x50] sm:$0xff] %v2327
          %2360 = vst [vmem:[%s391 + $0x58] sm:$0xff] %v2328
          %2361 = vst [vmem:[%s391 + $0x60] sm:$0xff] %v2329
          %2362 = vst [vmem:[%s391 + $0x68] sm:$0xff] %v2330
          %2363 = vst [vmem:[%s391 + $0x70] sm:$0xff] %v2331
          %2364 = vst [vmem:[%s391 + $0x78] sm:$0xff] %v2332
          %2365 = vst [vmem:[%s391 + $0x80] sm:$0xff] %v2333
          %2366 = vst [vmem:[%s391 + $0x88] sm:$0xff] %v2334
          %2367 = vst [vmem:[%s391 + $0x90] sm:$0xff] %v2335
          %2368 = vst [vmem:[%s391 + $0x98] sm:$0xff] %v2336
          %2369 = vst [vmem:[%s391 + $0xa0] sm:$0xff] %v2337
          %2370 = vst [vmem:[%s391 + $0xa8] sm:$0xff] %v2338
          %2371 = vst [vmem:[%s391 + $0xb0] sm:$0xff] %v2339
          %2372 = vst [vmem:[%s391 + $0xb8] sm:$0xff] %v2340
          %2373 = vst [vmem:[%s391 + $0xc0] sm:$0xff] %v2341
          %2374 = vst [vmem:[%s391 + $0xc8] sm:$0xff] %v2342
          %2375 = vst [vmem:[%s391 + $0xd0] sm:$0xff] %v2343
          %2376 = vst [vmem:[%s391 + $0xd8] sm:$0xff] %v2344
          %2377 = vst [vmem:[%s391 + $0xe0] sm:$0xff] %v2345
          %2378 = vst [vmem:[%s391 + $0xe8] sm:$0xff] %v2346
          %2379 = vst [vmem:[%s391 + $0xf0] sm:$0xff] %v2347
          %2380 = vst [vmem:[%s391 + $0xf8] sm:$0xff] %v2348
        $region72: #{tpu_custom_call.1} parent=43 // pred_fallthru
          _
        %s2381 = sand.u32 %s190, 1
        %s2382 = scalar_lea.sflag [#allocation4], %s2381
        %s2383 = sand.u32 %s190, 1
        %s2384 = smul.addr %s2383, 256
        %s2385 = scalar_lea.vmem [#allocation11], %s2384
        // Predicated region
        $region73: #{tpu_custom_call.1} parent=43 // pred_check
          %p2386 = pneg %p200
        $region74: #{tpu_custom_call.1} parent=43 // pred_check_branch
          %2388 = sbr.rel (%p2386) target = $region76
        $region75: #{tpu_custom_call.1} parent=43 // pred_region
          %s2389 = smul.u32 32, %s29
          %s2391 = ssub.s32 4096, 4096
          %2392 = vsyncadd %s2382, %s2391
          %s2393 = smul.addr %s2389, 128
          %s2394 = scalar_lea.hbm %s6, %s2393
          %s2395 = sshll.u32 %s2385, 4
          %s2396 = int_to_ptr.vmem [resolvable:$true] %s2395
          %2401 = dma.vmem_to_hbm [thread:$0]  %s2396, 4096, %s2394, %s2382, 128, 128, 8
        $region76: #{tpu_custom_call.1} parent=43 // pred_fallthru
          _
      $region44: #{tpu_custom_call.1} parent=5 // pred_fallthru
        _
      %p2402 = scmp.le.s32.totalorder 2, %s20
      // Predicated region
      $region77: #{tpu_custom_call.1} parent=5 // pred_check
        %p2403 = pneg %p2402
      $region78: #{tpu_custom_call.1} parent=5 // pred_check_branch
        %2405 = sbr.rel (%p2403) target = $region80
      $region79: #{tpu_custom_call.1} parent=5 // pred_region
        %s2406 = ssub.s32 %s20, 2
        // Predicated region
        $region81: #{tpu_custom_call.1} parent=79 // pred_check
          %p2407 = pneg %p206
        $region82: #{tpu_custom_call.1} parent=79 // pred_check_branch
          %2409 = sbr.rel (%p2407) target = $region84
        $region83: #{tpu_custom_call.1} parent=79 // pred_region
          %s2410 = sand.u32 %s191, 1
          %s2411 = scalar_lea.sflag [#allocation4], %s2410
          %s2412 = sand.u32 %s191, 1
          %s2413 = smul.addr %s2412, 256
          %s2414 = scalar_lea.vmem [#allocation11], %s2413
          %2415 = dma.done %s2411, 4096
        $region84: #{tpu_custom_call.1} parent=79 // pred_fallthru
          _
      $region80: #{tpu_custom_call.1} parent=5 // pred_fallthru
        _
    $region6: #{tpu_custom_call.1} parent=1 // loop_footer
      %s24 = sadd.s32 1, %s20
    $region7: #{tpu_custom_call.1} parent=1 // loop_footer_branch
      %19 = sbr.rel target = $region3
    $region8: #{tpu_custom_call.1} parent=1 // loop_exit
      _
    %2416 = vsyncpa [#allocation3], 1
    %s2417 = scalar_lea.sflag [#allocation3], 1
    %2418 = vsyncpa %s2417, 1
    %2419 = vsyncpa [#allocation6], 1
    %2420 = vsyncpa [#allocation10], 1
    %2421 = vsyncpa [#allocation4], 1
    %s2422 = scalar_lea.sflag [#allocation4], 1
    %2423 = vsyncpa %s2422, 1

</llo_original>
